<compile_context>
chip_gen: v7x
topology: tpu7x:2x2x1
jax: 0.10.0
libtpu: 0.0.40
codegen_flags: <defaults>
</compile_context>

<pallas_src>
import functools

import jax
import jax.numpy as jnp
from jax.experimental import pallas as pl
from jax.experimental.pallas import tpu as pltpu


def _cross_attn_kernel(q_in_ref, t_in_ref, wq_ref, wkv_ref, wp_ref, bp_ref,
                       o_ref, *, num_heads, block_b, tokens, compute_dtype):
    """One block of `block_b` batch elements per grid step.

    q_in_ref / t_in_ref : (block_b*N, C) flattened token slabs (VMEM)
    wq_ref              : (C, C)   pre-transposed (in, out), scale folded in
    wkv_ref             : (C, 2C)  pre-transposed, K and V weights fused
    wp_ref              : (C, C)   pre-transposed (in, out)
    bp_ref              : (1, C)
    o_ref               : (block_b*N, C)
    """
    N = tokens
    H = num_heads
    M, C = q_in_ref.shape
    hd = C // H
    cd = compute_dtype

    x_q = q_in_ref[...]
    x_t = t_in_ref[...]

    # ---- projections (no bias; qkv_bias=False) ---------------------------
    # Weights are already (in, out): plain x @ W, no in-kernel transpose.
    # Scale is folded into Wq; K/V share one fused matmul.
    q = jnp.dot(x_q.astype(cd), wq_ref[...].astype(cd),
                preferred_element_type=jnp.float32)            # (M, C)
    kv = jnp.dot(x_t.astype(cd), wkv_ref[...].astype(cd),
                 preferred_element_type=jnp.float32)           # (M, 2C)
    k = kv[:, :C]
    v = kv[:, C:]

    # ---- multi-head attention, batched over (batch, head) ----------------
    def stack_heads(x):
        # (M, C) -> (block_b*H, N, hd): a leading batch axis lets both
        # attention phases run as single batched einsums instead of a Python
        # loop of tiny per-head matmuls.
        parts = []
        for b in range(block_b):
            rows = x[b * N:(b + 1) * N, :]
            for h in range(H):
                parts.append(rows[:, h * hd:(h + 1) * hd].reshape(1, N, hd))
        return jnp.concatenate(parts, axis=0)

    qs = stack_heads(q)
    ks = stack_heads(k)
    vs = stack_heads(v)

    s = jnp.einsum('bqd,bkd->bqk', qs, ks,
                   preferred_element_type=jnp.float32)         # (BH, N, N)
    s = s - jnp.max(s, axis=-1, keepdims=True)
    p = jnp.exp(s)
    p = p * pl.reciprocal(jnp.sum(p, axis=-1, keepdims=True), approx=True)
    # attn_drop is identity (p = 0.0 / eval)
    ctx = jnp.einsum('bqk,bkd->bqd', p.astype(cd), vs.astype(cd),
                     preferred_element_type=jnp.float32)       # (BH, N, hd)

    # Scatter heads back to channel-major layout so the output projection is
    # one full-width matmul.
    rows_out = []
    for b in range(block_b):
        rows_out.append(
            jnp.concatenate([ctx[b * H + h] for h in range(H)], axis=-1))
    ctx2 = jnp.concatenate(rows_out, axis=0) if block_b > 1 else rows_out[0]

    # ---- output projection (+bias); proj_drop identity --------------------
    out = jnp.dot(ctx2.astype(cd), wp_ref[...].astype(cd),
                  preferred_element_type=jnp.float32) + bp_ref[...]
    o_ref[...] = out.astype(o_ref.dtype)


def _pick_block_b(B, N, C):
    """Largest divisor of B that still leaves >=2 grid steps (v7x megacore),
    capped so the per-step input slab stays comfortably inside VMEM."""
    if B <= 1:
        return 1
    budget_rows = max(N, (4 << 20) // (4 * max(C, 1)))   # ~4 MiB per slab
    best = 1
    for bb in range(1, B // 2 + 1):
        if B % bb == 0 and bb * N <= budget_rows:
            best = bb
    return best


def cross_attention(query, target, wq, wk, wv, wp, bp, *, num_heads,
                    compute_dtype=jnp.float32, block_b=None):
    """query, target: (B, N, C). Weights in PyTorch nn.Linear (out, in) layout.

    Set compute_dtype=jnp.bfloat16 on v6e/v7x for large C/N configurations
    (MXU bf16 throughput); accumulation stays float32 either way.
    """
    B, N, C = query.shape
    assert target.shape == (B, N, C)
    assert C % num_heads == 0
    head_dim = C // num_heads
    scale = head_dim ** (-0.5)

    if block_b is None:
        block_b = _pick_block_b(B, N, C)
    assert B % block_b == 0
    grid_b = B // block_b
    M = block_b * N

    # Weight prep (trace-time / one-off, outside the hot loop):
    #  - transpose to (in, out) so the kernel never transposes,
    #  - fold the softmax scale into Wq,
    #  - fuse K and V into one (C, 2C) weight.
    wq_t = (wq * jnp.asarray(scale, wq.dtype)).T.astype(compute_dtype)
    wkv_t = jnp.concatenate([wk.T, wv.T], axis=1).astype(compute_dtype)
    wp_t = wp.T.astype(compute_dtype)
    bp2 = bp.reshape(1, C).astype(jnp.float32)

    # Flatten (B, N, C) -> (B*N, C): each grid step sees a tall, sublane-dense
    # slab and the projections get M = block_b*N rows of MXU work.
    q2 = query.reshape(B * N, C)
    t2 = target.reshape(B * N, C)

    kernel = functools.partial(
        _cross_attn_kernel, num_heads=num_heads, block_b=block_b, tokens=N,
        compute_dtype=compute_dtype)

    out2 = pl.pallas_call(
        kernel,
        out_shape=jax.ShapeDtypeStruct((B * N, C), query.dtype),
        grid_spec=pltpu.PrefetchScalarGridSpec(
            num_scalar_prefetch=0,
            grid=(grid_b,),
            in_specs=[
                pl.BlockSpec((M, C), lambda i: (i, 0)),       # query slab
                pl.BlockSpec((M, C), lambda i: (i, 0)),       # target slab
                pl.BlockSpec((C, C), lambda i: (0, 0)),       # Wq^T * scale
                pl.BlockSpec((C, 2 * C), lambda i: (0, 0)),   # [Wk^T | Wv^T]
                pl.BlockSpec((C, C), lambda i: (0, 0)),       # Wproj^T
                pl.BlockSpec((1, C), lambda i: (0, 0)),       # bproj
            ],
            out_specs=pl.BlockSpec((M, C), lambda i: (i, 0)),
        ),
        compiler_params=pltpu.CompilerParams(
            dimension_semantics=("parallel",)),
    )(q2, t2, wq_t, wkv_t, wp_t, bp2)

    return out2.reshape(B, N, C)


def cross_attention_ref(query, target, wq, wk, wv, wp, bp, *, num_heads):
    """Pure-JAX reference matching the PyTorch forward."""
    B, N, C = query.shape
    hd = C // num_heads
    scale = hd ** (-0.5)
    q = (query @ wq.T).reshape(B, N, num_heads, hd).transpose(0, 2, 1, 3)
    k = (target @ wk.T).reshape(B, N, num_heads, hd).transpose(0, 2, 1, 3)
    v = (target @ wv.T).reshape(B, N, num_heads, hd).transpose(0, 2, 1, 3)
    attn = (q @ jnp.swapaxes(k, -2, -1)) * scale
    attn = jax.nn.softmax(attn, axis=-1)
    out = (attn @ v).transpose(0, 2, 1, 3).reshape(B, N, C)
    return out @ wp.T + bp


if __name__ == "__main__":
    # Small shapes consistent with the module: dim=32, num_heads=8 -> head_dim=4
    B, N, C = 2, 8, 32
    num_heads = 8

    key = jax.random.PRNGKey(0)
    kq, kt, k1, k2, k3, k4, k5 = jax.random.split(key, 7)

    query = jax.random.normal(kq, (B, N, C), dtype=jnp.float32)
    target = jax.random.normal(kt, (B, N, C), dtype=jnp.float32)

    # Deterministic parameter init (PyTorch nn.Linear (out, in) layout).
    lim = 1.0 / (C ** 0.5)
    wq = jax.random.uniform(k1, (C, C), jnp.float32, -lim, lim)
    wk = jax.random.uniform(k2, (C, C), jnp.float32, -lim, lim)
    wv = jax.random.uniform(k3, (C, C), jnp.float32, -lim, lim)
    wp = jax.random.uniform(k4, (C, C), jnp.float32, -lim, lim)
    bp = jax.random.uniform(k5, (C,), jnp.float32, -lim, lim)

    out = cross_attention(query, target, wq, wk, wv, wp, bp, num_heads=num_heads)
    out = jax.block_until_ready(out)

    ref = cross_attention_ref(query, target, wq, wk, wv, wp, bp, num_heads=num_heads)
    assert out.shape == (B, N, C)
    # slightly loosened tolerance: softmax denom uses the EUP approx reciprocal
    assert jnp.allclose(out, ref, atol=2e-3, rtol=2e-3), "mismatch vs reference"

    print("KERNEL_OK")
</pallas_src>

<mosaic_0001>
module attributes {stable_mosaic.version = 11 : i64} {
  func.func @_cross_attn_kernel(%arg0: i32, %arg1: memref<8x32xf32, #tpu.memory_space<vmem>>, %arg2: memref<8x32xf32, #tpu.memory_space<vmem>>, %arg3: memref<32x32xf32, #tpu.memory_space<vmem>>, %arg4: memref<32x64xf32, #tpu.memory_space<vmem>>, %arg5: memref<32x32xf32, #tpu.memory_space<vmem>>, %arg6: memref<1x32xf32, #tpu.memory_space<vmem>>, %arg7: memref<8x32xf32, #tpu.memory_space<vmem>>) attributes {dimension_semantics = [#tpu.dimension_semantics<parallel>], iteration_bounds = array<i64: 2>, scalar_prefetch = 0 : i64, scratch_operands = 0 : i64, tpu.core_type = #tpu.core_type<tc>, window_params = [{transform_indices = @transform_0, window_bounds = array<i64: 8, 32>}, {transform_indices = @transform_1, window_bounds = array<i64: 8, 32>}, {pipeline_mode = #tpu.pipeline_mode<synchronous>, transform_indices = @transform_2, window_bounds = array<i64: 32, 32>}, {pipeline_mode = #tpu.pipeline_mode<synchronous>, transform_indices = @transform_3, window_bounds = array<i64: 32, 64>}, {pipeline_mode = #tpu.pipeline_mode<synchronous>, transform_indices = @transform_4, window_bounds = array<i64: 32, 32>}, {pipeline_mode = #tpu.pipeline_mode<synchronous>, transform_indices = @transform_5, window_bounds = array<i64: 1, 32>}, {transform_indices = @transform_6, window_bounds = array<i64: 8, 32>}]} {
    %c0 = arith.constant 0 : index
    %c0_0 = arith.constant 0 : index
    %0 = vector.load %arg1[%c0, %c0_0] : memref<8x32xf32, #tpu.memory_space<vmem>>, vector<8x32xf32>
    %c0_1 = arith.constant 0 : index
    %c0_2 = arith.constant 0 : index
    %1 = vector.load %arg2[%c0_1, %c0_2] : memref<8x32xf32, #tpu.memory_space<vmem>>, vector<8x32xf32>
    %c0_3 = arith.constant 0 : index
    %c0_4 = arith.constant 0 : index
    %2 = vector.load %arg3[%c0_3, %c0_4] : memref<32x32xf32, #tpu.memory_space<vmem>>, vector<32x32xf32>
    %cst = arith.constant dense<0.000000e+00> : vector<8x32xf32>
    %3 = tpu.matmul %0, %2, %cst {dimension_numbers = #tpu.dot_dimension_numbers<[1], [0], [0], [1], [0, 0, 1, 1], [], []>} : vector<8x32xf32>, vector<32x32xf32>, vector<8x32xf32> -> vector<8x32xf32>
    %c0_5 = arith.constant 0 : index
    %c0_6 = arith.constant 0 : index
    %4 = vector.load %arg4[%c0_5, %c0_6] : memref<32x64xf32, #tpu.memory_space<vmem>>, vector<32x64xf32>
    %cst_7 = arith.constant dense<0.000000e+00> : vector<8x64xf32>
    %5 = tpu.matmul %1, %4, %cst_7 {dimension_numbers = #tpu.dot_dimension_numbers<[1], [0], [0], [1], [0, 0, 1, 1], [], []>} : vector<8x32xf32>, vector<32x64xf32>, vector<8x64xf32> -> vector<8x64xf32>
    %6 = vector.extract_strided_slice %5 {offsets = [0, 0], sizes = [8, 32], strides = [1, 1]} : vector<8x64xf32> to vector<8x32xf32>
    %7 = vector.extract_strided_slice %5 {offsets = [0, 32], sizes = [8, 32], strides = [1, 1]} : vector<8x64xf32> to vector<8x32xf32>
    %8 = vector.extract_strided_slice %3 {offsets = [0, 0], sizes = [8, 4], strides = [1, 1]} : vector<8x32xf32> to vector<8x4xf32>
    %9 = vector.shape_cast %8 : vector<8x4xf32> to vector<1x8x4xf32>
    %10 = vector.extract_strided_slice %3 {offsets = [0, 4], sizes = [8, 4], strides = [1, 1]} : vector<8x32xf32> to vector<8x4xf32>
    %11 = vector.shape_cast %10 : vector<8x4xf32> to vector<1x8x4xf32>
    %12 = vector.extract_strided_slice %3 {offsets = [0, 8], sizes = [8, 4], strides = [1, 1]} : vector<8x32xf32> to vector<8x4xf32>
    %13 = vector.shape_cast %12 : vector<8x4xf32> to vector<1x8x4xf32>
    %14 = vector.extract_strided_slice %3 {offsets = [0, 12], sizes = [8, 4], strides = [1, 1]} : vector<8x32xf32> to vector<8x4xf32>
    %15 = vector.shape_cast %14 : vector<8x4xf32> to vector<1x8x4xf32>
    %16 = vector.extract_strided_slice %3 {offsets = [0, 16], sizes = [8, 4], strides = [1, 1]} : vector<8x32xf32> to vector<8x4xf32>
    %17 = vector.shape_cast %16 : vector<8x4xf32> to vector<1x8x4xf32>
    %18 = vector.extract_strided_slice %3 {offsets = [0, 20], sizes = [8, 4], strides = [1, 1]} : vector<8x32xf32> to vector<8x4xf32>
    %19 = vector.shape_cast %18 : vector<8x4xf32> to vector<1x8x4xf32>
    %20 = vector.extract_strided_slice %3 {offsets = [0, 24], sizes = [8, 4], strides = [1, 1]} : vector<8x32xf32> to vector<8x4xf32>
    %21 = vector.shape_cast %20 : vector<8x4xf32> to vector<1x8x4xf32>
    %22 = vector.extract_strided_slice %3 {offsets = [0, 28], sizes = [8, 4], strides = [1, 1]} : vector<8x32xf32> to vector<8x4xf32>
    %23 = vector.shape_cast %22 : vector<8x4xf32> to vector<1x8x4xf32>
    %24 = tpu.concatenate %9, %11, %13, %15, %17, %19, %21, %23 in 0 : vector<1x8x4xf32>, vector<1x8x4xf32>, vector<1x8x4xf32>, vector<1x8x4xf32>, vector<1x8x4xf32>, vector<1x8x4xf32>, vector<1x8x4xf32>, vector<1x8x4xf32> -> vector<8x8x4xf32>
    %25 = vector.extract_strided_slice %6 {offsets = [0, 0], sizes = [8, 4], strides = [1, 1]} : vector<8x32xf32> to vector<8x4xf32>
    %26 = vector.shape_cast %25 : vector<8x4xf32> to vector<1x8x4xf32>
    %27 = vector.extract_strided_slice %6 {offsets = [0, 4], sizes = [8, 4], strides = [1, 1]} : vector<8x32xf32> to vector<8x4xf32>
    %28 = vector.shape_cast %27 : vector<8x4xf32> to vector<1x8x4xf32>
    %29 = vector.extract_strided_slice %6 {offsets = [0, 8], sizes = [8, 4], strides = [1, 1]} : vector<8x32xf32> to vector<8x4xf32>
    %30 = vector.shape_cast %29 : vector<8x4xf32> to vector<1x8x4xf32>
    %31 = vector.extract_strided_slice %6 {offsets = [0, 12], sizes = [8, 4], strides = [1, 1]} : vector<8x32xf32> to vector<8x4xf32>
    %32 = vector.shape_cast %31 : vector<8x4xf32> to vector<1x8x4xf32>
    %33 = vector.extract_strided_slice %6 {offsets = [0, 16], sizes = [8, 4], strides = [1, 1]} : vector<8x32xf32> to vector<8x4xf32>
    %34 = vector.shape_cast %33 : vector<8x4xf32> to vector<1x8x4xf32>
    %35 = vector.extract_strided_slice %6 {offsets = [0, 20], sizes = [8, 4], strides = [1, 1]} : vector<8x32xf32> to vector<8x4xf32>
    %36 = vector.shape_cast %35 : vector<8x4xf32> to vector<1x8x4xf32>
    %37 = vector.extract_strided_slice %6 {offsets = [0, 24], sizes = [8, 4], strides = [1, 1]} : vector<8x32xf32> to vector<8x4xf32>
    %38 = vector.shape_cast %37 : vector<8x4xf32> to vector<1x8x4xf32>
    %39 = vector.extract_strided_slice %6 {offsets = [0, 28], sizes = [8, 4], strides = [1, 1]} : vector<8x32xf32> to vector<8x4xf32>
    %40 = vector.shape_cast %39 : vector<8x4xf32> to vector<1x8x4xf32>
    %41 = tpu.concatenate %26, %28, %30, %32, %34, %36, %38, %40 in 0 : vector<1x8x4xf32>, vector<1x8x4xf32>, vector<1x8x4xf32>, vector<1x8x4xf32>, vector<1x8x4xf32>, vector<1x8x4xf32>, vector<1x8x4xf32>, vector<1x8x4xf32> -> vector<8x8x4xf32>
    %42 = vector.extract_strided_slice %7 {offsets = [0, 0], sizes = [8, 4], strides = [1, 1]} : vector<8x32xf32> to vector<8x4xf32>
    %43 = vector.shape_cast %42 : vector<8x4xf32> to vector<1x8x4xf32>
    %44 = vector.extract_strided_slice %7 {offsets = [0, 4], sizes = [8, 4], strides = [1, 1]} : vector<8x32xf32> to vector<8x4xf32>
    %45 = vector.shape_cast %44 : vector<8x4xf32> to vector<1x8x4xf32>
    %46 = vector.extract_strided_slice %7 {offsets = [0, 8], sizes = [8, 4], strides = [1, 1]} : vector<8x32xf32> to vector<8x4xf32>
    %47 = vector.shape_cast %46 : vector<8x4xf32> to vector<1x8x4xf32>
    %48 = vector.extract_strided_slice %7 {offsets = [0, 12], sizes = [8, 4], strides = [1, 1]} : vector<8x32xf32> to vector<8x4xf32>
    %49 = vector.shape_cast %48 : vector<8x4xf32> to vector<1x8x4xf32>
    %50 = vector.extract_strided_slice %7 {offsets = [0, 16], sizes = [8, 4], strides = [1, 1]} : vector<8x32xf32> to vector<8x4xf32>
    %51 = vector.shape_cast %50 : vector<8x4xf32> to vector<1x8x4xf32>
    %52 = vector.extract_strided_slice %7 {offsets = [0, 20], sizes = [8, 4], strides = [1, 1]} : vector<8x32xf32> to vector<8x4xf32>
    %53 = vector.shape_cast %52 : vector<8x4xf32> to vector<1x8x4xf32>
    %54 = vector.extract_strided_slice %7 {offsets = [0, 24], sizes = [8, 4], strides = [1, 1]} : vector<8x32xf32> to vector<8x4xf32>
    %55 = vector.shape_cast %54 : vector<8x4xf32> to vector<1x8x4xf32>
    %56 = vector.extract_strided_slice %7 {offsets = [0, 28], sizes = [8, 4], strides = [1, 1]} : vector<8x32xf32> to vector<8x4xf32>
    %57 = vector.shape_cast %56 : vector<8x4xf32> to vector<1x8x4xf32>
    %58 = tpu.concatenate %43, %45, %47, %49, %51, %53, %55, %57 in 0 : vector<1x8x4xf32>, vector<1x8x4xf32>, vector<1x8x4xf32>, vector<1x8x4xf32>, vector<1x8x4xf32>, vector<1x8x4xf32>, vector<1x8x4xf32>, vector<1x8x4xf32> -> vector<8x8x4xf32>
    "tpu.trace_start"() <{level = 10 : i32, message = "bqd,bkd->bqk"}> : () -> ()
    %cst_8 = arith.constant dense<0.000000e+00> : vector<8x8x8xf32>
    %59 = tpu.matmul %24, %41, %cst_8 {dimension_numbers = #tpu.dot_dimension_numbers<[2], [2], [1], [1], [0, 0, 0, 1, 1, 1], [0], [0]>} : vector<8x8x4xf32>, vector<8x8x4xf32>, vector<8x8x8xf32> -> vector<8x8x8xf32>
    "tpu.trace_stop"() : () -> ()
    %cst_9 = arith.constant dense<0xFF800000> : vector<8x8xf32>
    %60 = vector.multi_reduction <maximumf>, %59, %cst_9 [2] : vector<8x8x8xf32> to vector<8x8xf32>
    %61 = vector.shape_cast %60 : vector<8x8xf32> to vector<8x8x1xf32>
    %62 = vector.broadcast %61 : vector<8x8x1xf32> to vector<8x8x8xf32>
    %63 = arith.subf %59, %62 : vector<8x8x8xf32>
    %64 = math.exp %63 : vector<8x8x8xf32>
    %cst_10 = arith.constant dense<0.000000e+00> : vector<8x8xf32>
    %65 = vector.multi_reduction <add>, %64, %cst_10 [2] : vector<8x8x8xf32> to vector<8x8xf32>
    %66 = vector.shape_cast %65 : vector<8x8xf32> to vector<8x8x1xf32>
    %67 = tpu.reciprocal %66 {approx = true} : vector<8x8x1xf32> -> vector<8x8x1xf32>
    %68 = vector.broadcast %67 : vector<8x8x1xf32> to vector<8x8x8xf32>
    %69 = arith.mulf %64, %68 : vector<8x8x8xf32>
    "tpu.trace_start"() <{level = 10 : i32, message = "bqk,bkd->bqd"}> : () -> ()
    %cst_11 = arith.constant dense<0.000000e+00> : vector<8x8x4xf32>
    %70 = tpu.matmul %69, %58, %cst_11 {dimension_numbers = #tpu.dot_dimension_numbers<[2], [1], [1], [2], [0, 0, 0, 1, 1, 2], [0], [0]>} : vector<8x8x8xf32>, vector<8x8x4xf32>, vector<8x8x4xf32> -> vector<8x8x4xf32>
    "tpu.trace_stop"() : () -> ()
    %71 = vector.extract_strided_slice %70 {offsets = [0, 0, 0], sizes = [1, 8, 4], strides = [1, 1, 1]} : vector<8x8x4xf32> to vector<1x8x4xf32>
    %72 = vector.shape_cast %71 : vector<1x8x4xf32> to vector<8x4xf32>
    %73 = vector.extract_strided_slice %70 {offsets = [1, 0, 0], sizes = [1, 8, 4], strides = [1, 1, 1]} : vector<8x8x4xf32> to vector<1x8x4xf32>
    %74 = vector.shape_cast %73 : vector<1x8x4xf32> to vector<8x4xf32>
    %75 = vector.extract_strided_slice %70 {offsets = [2, 0, 0], sizes = [1, 8, 4], strides = [1, 1, 1]} : vector<8x8x4xf32> to vector<1x8x4xf32>
    %76 = vector.shape_cast %75 : vector<1x8x4xf32> to vector<8x4xf32>
    %77 = vector.extract_strided_slice %70 {offsets = [3, 0, 0], sizes = [1, 8, 4], strides = [1, 1, 1]} : vector<8x8x4xf32> to vector<1x8x4xf32>
    %78 = vector.shape_cast %77 : vector<1x8x4xf32> to vector<8x4xf32>
    %79 = vector.extract_strided_slice %70 {offsets = [4, 0, 0], sizes = [1, 8, 4], strides = [1, 1, 1]} : vector<8x8x4xf32> to vector<1x8x4xf32>
    %80 = vector.shape_cast %79 : vector<1x8x4xf32> to vector<8x4xf32>
    %81 = vector.extract_strided_slice %70 {offsets = [5, 0, 0], sizes = [1, 8, 4], strides = [1, 1, 1]} : vector<8x8x4xf32> to vector<1x8x4xf32>
    %82 = vector.shape_cast %81 : vector<1x8x4xf32> to vector<8x4xf32>
    %83 = vector.extract_strided_slice %70 {offsets = [6, 0, 0], sizes = [1, 8, 4], strides = [1, 1, 1]} : vector<8x8x4xf32> to vector<1x8x4xf32>
    %84 = vector.shape_cast %83 : vector<1x8x4xf32> to vector<8x4xf32>
    %85 = vector.extract_strided_slice %70 {offsets = [7, 0, 0], sizes = [1, 8, 4], strides = [1, 1, 1]} : vector<8x8x4xf32> to vector<1x8x4xf32>
    %86 = vector.shape_cast %85 : vector<1x8x4xf32> to vector<8x4xf32>
    %87 = tpu.concatenate %72, %74, %76, %78, %80, %82, %84, %86 in 1 : vector<8x4xf32>, vector<8x4xf32>, vector<8x4xf32>, vector<8x4xf32>, vector<8x4xf32>, vector<8x4xf32>, vector<8x4xf32>, vector<8x4xf32> -> vector<8x32xf32>
    %c0_12 = arith.constant 0 : index
    %c0_13 = arith.constant 0 : index
    %88 = vector.load %arg5[%c0_12, %c0_13] : memref<32x32xf32, #tpu.memory_space<vmem>>, vector<32x32xf32>
    %cst_14 = arith.constant dense<0.000000e+00> : vector<8x32xf32>
    %89 = tpu.matmul %87, %88, %cst_14 {dimension_numbers = #tpu.dot_dimension_numbers<[1], [0], [0], [1], [0, 0, 1, 1], [], []>} : vector<8x32xf32>, vector<32x32xf32>, vector<8x32xf32> -> vector<8x32xf32>
    %c0_15 = arith.constant 0 : index
    %c0_16 = arith.constant 0 : index
    %90 = vector.load %arg6[%c0_15, %c0_16] : memref<1x32xf32, #tpu.memory_space<vmem>>, vector<1x32xf32>
    %91 = vector.broadcast %90 : vector<1x32xf32> to vector<8x32xf32>
    %92 = arith.addf %89, %91 : vector<8x32xf32>
    %c0_17 = arith.constant 0 : index
    %c0_18 = arith.constant 0 : index
    %93 = vector.load %arg7[%c0_17, %c0_18] : memref<8x32xf32, #tpu.memory_space<vmem>>, vector<8x32xf32>
    tpu.vector_store %arg7[%c0_17, %c0_18], %92 {strides = array<i32>} : memref<8x32xf32, #tpu.memory_space<vmem>>, vector<8x32xf32>,
    return
  }
  func.func @transform_0(%arg0: i32) -> (i32, i32) {
    %c0_i32 = arith.constant 0 : i32
    %c0_i32_0 = arith.constant 0 : i32
    return %arg0, %c0_i32 : i32, i32
  }
  func.func @transform_1(%arg0: i32) -> (i32, i32) {
    %c0_i32 = arith.constant 0 : i32
    %c0_i32_0 = arith.constant 0 : i32
    return %arg0, %c0_i32 : i32, i32
  }
  func.func @transform_2(%arg0: i32) -> (i32, i32) {
    %c0_i32 = arith.constant 0 : i32
    %c0_i32_0 = arith.constant 0 : i32
    %c0_i32_1 = arith.constant 0 : i32
    return %c0_i32, %c0_i32_0 : i32, i32
  }
  func.func @transform_3(%arg0: i32) -> (i32, i32) {
    %c0_i32 = arith.constant 0 : i32
    %c0_i32_0 = arith.constant 0 : i32
    %c0_i32_1 = arith.constant 0 : i32
    return %c0_i32, %c0_i32_0 : i32, i32
  }
  func.func @transform_4(%arg0: i32) -> (i32, i32) {
    %c0_i32 = arith.constant 0 : i32
    %c0_i32_0 = arith.constant 0 : i32
    %c0_i32_1 = arith.constant 0 : i32
    return %c0_i32, %c0_i32_0 : i32, i32
  }
  func.func @transform_5(%arg0: i32) -> (i32, i32) {
    %c0_i32 = arith.constant 0 : i32
    %c0_i32_0 = arith.constant 0 : i32
    %c0_i32_1 = arith.constant 0 : i32
    return %c0_i32, %c0_i32_0 : i32, i32
  }
  func.func @transform_6(%arg0: i32) -> (i32, i32) {
    %c0_i32 = arith.constant 0 : i32
    %c0_i32_0 = arith.constant 0 : i32
    return %arg0, %c0_i32 : i32, i32
  }
}

</mosaic_0001>

<llo_original>
// kernel: tpu_custom_call.1
$region0: #{tpu_custom_call.1}
  #allocation0 [shape = 'u32[]', space=smem, size = 0x4, offset = 0x4, fixed_abs, tag = 'smem constant byte address 0x4 - core index']
  #allocation1 [shape = 'u32[144,128]{1,0:T(1,128)}', space=vmem, size = 0x12000, scoped, tag = 'internal scratch']
  %s0 = inlined_call_operand.hbm [shape: f32[16,32], index: 0, kind: input, shape index: {}]
  %s1 = inlined_call_operand.hbm [shape: f32[16,32], index: 1, kind: input, shape index: {}]
  %s2 = inlined_call_operand.hbm [shape: f32[32,32], index: 2, kind: input, shape index: {}]
  %s3 = inlined_call_operand.hbm [shape: f32[32,64], index: 3, kind: input, shape index: {}]
  %s4 = inlined_call_operand.hbm [shape: f32[32,32], index: 4, kind: input, shape index: {}]
  %s5 = inlined_call_operand.vmem [shape: f32[1,32], index: 5, kind: input, shape index: {}]
  %s6 = inlined_call_operand.hbm [shape: f32[16,32], index: 6, kind: output, shape index: {}]
  %s7 = sld [smem:[#allocation0]]
  $region77: #{tpu_custom_call.1} parent=0
    _
  %s9 = ssub.s32 1, %s7
  %s10 = scalar_select 0, %s9, %s7
  $region1: #{tpu_custom_call.1} parent=0
    #allocation2 [shape = 'u8[8192]{0}', space=vmem, size = 0x2000, scoped, tag = 'input window, operand 0']
    #allocation3 [shape = 's32[2]{0}', space=sflag, size = 0x8, scoped, tag = 'scoped memory for tpu_custom_call.1']
    #allocation4 [shape = 's32[2]{0}', space=sflag, size = 0x8, scoped, tag = 'scoped memory for tpu_custom_call.1']
    #allocation5 [shape = 'u8[8192]{0}', space=vmem, size = 0x2000, scoped, tag = 'input window, operand 1']
    #allocation6 [shape = 's32[2]{0}', space=sflag, size = 0x8, scoped, tag = 'scoped memory for tpu_custom_call.1']
    #allocation7 [shape = 'u8[16384]{0}', space=vmem, size = 0x4000, scoped, tag = 'input window, operand 2, single buffered']
    #allocation8 [shape = 'u8[16384]{0}', space=vmem, size = 0x4000, scoped, tag = 'input window, operand 3, single buffered']
    #allocation9 [shape = 's32[1]{0}', space=sflag, size = 0x4, scoped, tag = 'scoped memory for tpu_custom_call.1']
    #allocation10 [shape = 'u8[16384]{0}', space=vmem, size = 0x4000, scoped, tag = 'input window, operand 4, single buffered']
    #allocation11 [shape = 'u8[8192]{0}', space=vmem, size = 0x2000, scoped, tag = 'output window, operand 0']
    %11 = vsyncpa [#allocation3], 0
    %s12 = scalar_lea.sflag [#allocation3], 1
    %13 = vsyncpa %s12, 0
    %14 = vsyncpa [#allocation6], 0
    %s15 = scalar_lea.sflag [#allocation6], 1
    %16 = vsyncpa %s15, 0
    %17 = vsyncpa [#allocation9], 0
    %18 = vsyncpa [#allocation4], 0
    %s19 = scalar_lea.sflag [#allocation4], 1
    %20 = vsyncpa %s19, 0
    loop: start=0, step=1, limit=4
    $region2: #{tpu_custom_call.1} parent=1 // loop_pre_header
      _
    $region3: #{tpu_custom_call.1} parent=1 // loop_header
      %s22 = sphi 0, %s26
      %p23 = scmp.ge.s32.totalorder %s22, 4
      %s32 = sphi 0, %s34
      %s35 = sphi 0, %s32
      %s36 = sphi 0, %s35
      %s52 = sphi 0, %s36
      %s58 = sphi 0, %s60
      %s61 = sphi 0, %s58
      %s62 = sphi 0, %s61
      %s78 = sphi 0, %s62
      %s82 = sphi 0, %s82
      %s84 = sphi 0, %s82
      %s85 = sphi 0, %s84
      %s99 = sphi 0, %s85
      %s103 = sphi 0, %s103
      %s105 = sphi 0, %s103
      %s106 = sphi 0, %s105
      %s120 = sphi 0, %s106
      %s124 = sphi 0, %s124
      %s126 = sphi 0, %s124
      %s127 = sphi 0, %s126
      %s141 = sphi 0, %s127
      %s145 = sphi 0, %s145
      %s147 = sphi 0, %s145
      %s148 = sphi 0, %s147
      %s162 = sphi 0, %s148
      %s168 = sphi 0, %s170
      %s171 = sphi 0, %s168
      %s172 = sphi 0, %s171
      %s188 = sphi 0, %s172
    $region4: #{tpu_custom_call.1} parent=1 // loop_header_branch
      %25 = sbr.rel (%p23) target = $region8
    $region5: #{tpu_custom_call.1} parent=1 // loop_body
      %s27 = ssub.s32 %s22, 1
      %s28 = ssub.s32 %s22, 2
      %s29 = sadd.s32 %s22, 1
      %s30 = ssub.s32 %s22, %s29
      %p31 = scmp.eq.s32.totalorder %s30, 0
      %s33 = sadd.s32 %s32, 1
      %s34 = scalar_select %p31, %s32, %s33
      %p37 = pneg %p31
      %p38 = scmp.eq.s32.totalorder %s22, 1
      %p39 = por %p37, %p38
      %p40 = scmp.ne.s32.totalorder %s32, %s35
      %p41 = scmp.eq.s32.totalorder %s22, 0
      %p42 = por %p40, %p41
      %p43 = scmp.ne.s32.totalorder %s32, %s35
      %p44 = scmp.eq.s32.totalorder %s27, 1
      %p45 = por %p43, %p44
      %p46 = scmp.ne.s32.totalorder %s35, %s36
      %p47 = scmp.eq.s32.totalorder %s27, 0
      %p48 = por %p46, %p47
      %p49 = scmp.ne.s32.totalorder %s35, %s36
      %p50 = scmp.eq.s32.totalorder %s28, 1
      %p51 = por %p49, %p50
      %p53 = scmp.ne.s32.totalorder %s36, %s52
      %p54 = scmp.eq.s32.totalorder %s28, 0
      %p55 = por %p53, %p54
      %s56 = ssub.s32 %s22, %s29
      %p57 = scmp.eq.s32.totalorder %s56, 0
      %s59 = sadd.s32 %s58, 1
      %s60 = scalar_select %p57, %s58, %s59
      %p63 = pneg %p57
      %p64 = scmp.eq.s32.totalorder %s22, 1
      %p65 = por %p63, %p64
      %p66 = scmp.ne.s32.totalorder %s58, %s61
      %p67 = scmp.eq.s32.totalorder %s22, 0
      %p68 = por %p66, %p67
      %p69 = scmp.ne.s32.totalorder %s58, %s61
      %p70 = scmp.eq.s32.totalorder %s27, 1
      %p71 = por %p69, %p70
      %p72 = scmp.ne.s32.totalorder %s61, %s62
      %p73 = scmp.eq.s32.totalorder %s27, 0
      %p74 = por %p72, %p73
      %p75 = scmp.ne.s32.totalorder %s61, %s62
      %p76 = scmp.eq.s32.totalorder %s28, 1
      %p77 = por %p75, %p76
      %p79 = scmp.ne.s32.totalorder %s62, %s78
      %p80 = scmp.eq.s32.totalorder %s28, 0
      %p81 = por %p79, %p80
      %s83 = sadd.s32 %s82, 1
      %p86 = scmp.eq.s32.totalorder %s22, 1
      %p87 = scmp.ne.s32.totalorder %s82, %s84
      %p88 = scmp.eq.s32.totalorder %s22, 0
      %p89 = por %p87, %p88
      %p90 = scmp.ne.s32.totalorder %s82, %s84
      %p91 = scmp.eq.s32.totalorder %s27, 1
      %p92 = por %p90, %p91
      %p93 = scmp.ne.s32.totalorder %s84, %s85
      %p94 = scmp.eq.s32.totalorder %s27, 0
      %p95 = por %p93, %p94
      %p96 = scmp.ne.s32.totalorder %s84, %s85
      %p97 = scmp.eq.s32.totalorder %s28, 1
      %p98 = por %p96, %p97
      %p100 = scmp.ne.s32.totalorder %s85, %s99
      %p101 = scmp.eq.s32.totalorder %s28, 0
      %p102 = por %p100, %p101
      %s104 = sadd.s32 %s103, 1
      %p107 = scmp.eq.s32.totalorder %s22, 1
      %p108 = scmp.ne.s32.totalorder %s103, %s105
      %p109 = scmp.eq.s32.totalorder %s22, 0
      %p110 = por %p108, %p109
      %p111 = scmp.ne.s32.totalorder %s103, %s105
      %p112 = scmp.eq.s32.totalorder %s27, 1
      %p113 = por %p111, %p112
      %p114 = scmp.ne.s32.totalorder %s105, %s106
      %p115 = scmp.eq.s32.totalorder %s27, 0
      %p116 = por %p114, %p115
      %p117 = scmp.ne.s32.totalorder %s105, %s106
      %p118 = scmp.eq.s32.totalorder %s28, 1
      %p119 = por %p117, %p118
      %p121 = scmp.ne.s32.totalorder %s106, %s120
      %p122 = scmp.eq.s32.totalorder %s28, 0
      %p123 = por %p121, %p122
      %s125 = sadd.s32 %s124, 1
      %p128 = scmp.eq.s32.totalorder %s22, 1
      %p129 = scmp.ne.s32.totalorder %s124, %s126
      %p130 = scmp.eq.s32.totalorder %s22, 0
      %p131 = por %p129, %p130
      %p132 = scmp.ne.s32.totalorder %s124, %s126
      %p133 = scmp.eq.s32.totalorder %s27, 1
      %p134 = por %p132, %p133
      %p135 = scmp.ne.s32.totalorder %s126, %s127
      %p136 = scmp.eq.s32.totalorder %s27, 0
      %p137 = por %p135, %p136
      %p138 = scmp.ne.s32.totalorder %s126, %s127
      %p139 = scmp.eq.s32.totalorder %s28, 1
      %p140 = por %p138, %p139
      %p142 = scmp.ne.s32.totalorder %s127, %s141
      %p143 = scmp.eq.s32.totalorder %s28, 0
      %p144 = por %p142, %p143
      %s146 = sadd.s32 %s145, 1
      %p149 = scmp.eq.s32.totalorder %s22, 1
      %p150 = scmp.ne.s32.totalorder %s145, %s147
      %p151 = scmp.eq.s32.totalorder %s22, 0
      %p152 = por %p150, %p151
      %p153 = scmp.ne.s32.totalorder %s145, %s147
      %p154 = scmp.eq.s32.totalorder %s27, 1
      %p155 = por %p153, %p154
      %p156 = scmp.ne.s32.totalorder %s147, %s148
      %p157 = scmp.eq.s32.totalorder %s27, 0
      %p158 = por %p156, %p157
      %p159 = scmp.ne.s32.totalorder %s147, %s148
      %p160 = scmp.eq.s32.totalorder %s28, 1
      %p161 = por %p159, %p160
      %p163 = scmp.ne.s32.totalorder %s148, %s162
      %p164 = scmp.eq.s32.totalorder %s28, 0
      %p165 = por %p163, %p164
      %s166 = ssub.s32 %s22, %s29
      %p167 = scmp.eq.s32.totalorder %s166, 0
      %s169 = sadd.s32 %s168, 1
      %s170 = scalar_select %p167, %s168, %s169
      %p173 = pneg %p167
      %p174 = scmp.eq.s32.totalorder %s22, 1
      %p175 = por %p173, %p174
      %p176 = scmp.ne.s32.totalorder %s168, %s171
      %p177 = scmp.eq.s32.totalorder %s22, 0
      %p178 = por %p176, %p177
      %p179 = scmp.ne.s32.totalorder %s168, %s171
      %p180 = scmp.eq.s32.totalorder %s27, 1
      %p181 = por %p179, %p180
      %p182 = scmp.ne.s32.totalorder %s171, %s172
      %p183 = scmp.eq.s32.totalorder %s27, 0
      %p184 = por %p182, %p183
      %p185 = scmp.ne.s32.totalorder %s171, %s172
      %p186 = scmp.eq.s32.totalorder %s28, 1
      %p187 = por %p185, %p186
      %p189 = scmp.ne.s32.totalorder %s172, %s188
      %p190 = scmp.eq.s32.totalorder %s28, 0
      %p191 = por %p189, %p190
      %p192 = scmp.le.s32.totalorder 1, %s22
      %p193 = scmp.lt.s32.totalorder %s22, 3
      %p194 = pnand %p192, %p193
      %p195 = pneg %p194
      // Predicated region
      $region9: #{tpu_custom_call.1} parent=5 // pred_check
        _
      $region10: #{tpu_custom_call.1} parent=5 // pred_check_branch
        %197 = sbr.rel (%p194) target = $region12
      $region11: #{tpu_custom_call.1} parent=5 // pred_region
        %s198 = ssub.s32 %s22, 1
        // Predicated region
        $region13: #{tpu_custom_call.1} parent=11 // pred_check
          %p199 = pneg %p95
        $region14: #{tpu_custom_call.1} parent=11 // pred_check_branch
          %201 = sbr.rel (%p199) target = $region16
        $region15: #{tpu_custom_call.1} parent=11 // pred_region
          %s203 = ssub.s32 512, 512
          %204 = vsyncadd [#allocation6], %s203
          %s205 = sshll.u32 [#allocation7], 4
          %s206 = int_to_ptr.vmem [resolvable:$true] %s205
          %211 = dma.hbm_to_vmem [thread:$0]  %s2, 512, %s206, [#allocation6], 128, 128, 8
        $region16: #{tpu_custom_call.1} parent=11 // pred_fallthru
          _
        // Predicated region
        $region17: #{tpu_custom_call.1} parent=11 // pred_check
          %p212 = pneg %p116
        $region18: #{tpu_custom_call.1} parent=11 // pred_check_branch
          %214 = sbr.rel (%p212) target = $region20
        $region19: #{tpu_custom_call.1} parent=11 // pred_region
          %s216 = ssub.s32 512, 512
          %217 = vsyncadd [#allocation9], %s216
          %s218 = sshll.u32 [#allocation8], 4
          %s219 = int_to_ptr.vmem [resolvable:$true] %s218
          %224 = dma.hbm_to_vmem [thread:$0]  %s3, 512, %s219, [#allocation9], 128, 128, 8
        $region20: #{tpu_custom_call.1} parent=11 // pred_fallthru
          _
        // Predicated region
        $region21: #{tpu_custom_call.1} parent=11 // pred_check
          %p225 = pneg %p137
        $region22: #{tpu_custom_call.1} parent=11 // pred_check_branch
          %227 = sbr.rel (%p225) target = $region24
        $region23: #{tpu_custom_call.1} parent=11 // pred_region
          %s229 = ssub.s32 512, 512
          %230 = vsyncadd [#allocation9], %s229
          %s231 = sshll.u32 [#allocation10], 4
          %s232 = int_to_ptr.vmem [resolvable:$true] %s231
          %237 = dma.hbm_to_vmem [thread:$0]  %s4, 512, %s232, [#allocation9], 128, 128, 8
        $region24: #{tpu_custom_call.1} parent=11 // pred_fallthru
          _
        // Predicated region
        $region25: #{tpu_custom_call.1} parent=11 // pred_check
          %p238 = pneg %p158
        $region26: #{tpu_custom_call.1} parent=11 // pred_check_branch
          %240 = sbr.rel (%p238) target = $region28
        $region27: #{tpu_custom_call.1} parent=11 // pred_region
          _
        $region28: #{tpu_custom_call.1} parent=11 // pred_fallthru
          _
      $region12: #{tpu_custom_call.1} parent=5 // pred_fallthru
        _
      %p241 = scmp.lt.s32.totalorder %s22, 2
      // Predicated region
      $region29: #{tpu_custom_call.1} parent=5 // pred_check
        %p242 = pneg %p241
      $region30: #{tpu_custom_call.1} parent=5 // pred_check_branch
        %244 = sbr.rel (%p242) target = $region32
      $region31: #{tpu_custom_call.1} parent=5 // pred_region
        // Predicated region
        $region33: #{tpu_custom_call.1} parent=31 // pred_check
          %p245 = pneg %p42
        $region34: #{tpu_custom_call.1} parent=31 // pred_check_branch
          %247 = sbr.rel (%p245) target = $region36
        $region35: #{tpu_custom_call.1} parent=31 // pred_region
          %s248 = sand.u32 %s32, 1
          %s249 = scalar_lea.sflag [#allocation3], %s248
          %s250 = sand.u32 %s32, 1
          %s251 = smul.addr %s250, 8
          %s252 = scalar_lea.vmem [#allocation2], %s251
          %s254 = ssub.s32 128, 128
          %255 = vsyncadd %s249, %s254
          %s256 = smul.addr %s22, 128
          %s257 = scalar_lea.hbm %s0, %s256
          %s259 = sshll.u32 %s252, 4
          %s260 = int_to_ptr.vmem [resolvable:$true] %s259
          %262 = dma.hbm_to_vmem [thread:$0]  %s257, 128, %s260, %s249
        $region36: #{tpu_custom_call.1} parent=31 // pred_fallthru
          _
        // Predicated region
        $region37: #{tpu_custom_call.1} parent=31 // pred_check
          %p263 = pneg %p68
        $region38: #{tpu_custom_call.1} parent=31 // pred_check_branch
          %265 = sbr.rel (%p263) target = $region40
        $region39: #{tpu_custom_call.1} parent=31 // pred_region
          %s266 = sand.u32 %s22, 1
          %s267 = scalar_lea.sflag [#allocation6], %s266
          %s268 = sand.u32 %s58, 1
          %s269 = smul.addr %s268, 8
          %s270 = scalar_lea.vmem [#allocation5], %s269
          %s272 = ssub.s32 128, 128
          %273 = vsyncadd %s267, %s272
          %s274 = smul.addr %s22, 128
          %s275 = scalar_lea.hbm %s1, %s274
          %s277 = sshll.u32 %s270, 4
          %s278 = int_to_ptr.vmem [resolvable:$true] %s277
          %280 = dma.hbm_to_vmem [thread:$0]  %s275, 128, %s278, %s267
        $region40: #{tpu_custom_call.1} parent=31 // pred_fallthru
          _
      $region32: #{tpu_custom_call.1} parent=5 // pred_fallthru
        _
      %p281 = scmp.le.s32.totalorder 1, %s22
      %p282 = scmp.lt.s32.totalorder %s22, 3
      %p283 = pnand %p281, %p282
      %p284 = pneg %p283
      // Predicated region
      $region41: #{tpu_custom_call.1} parent=5 // pred_check
        _
      $region42: #{tpu_custom_call.1} parent=5 // pred_check_branch
        %286 = sbr.rel (%p283) target = $region44
      $region43: #{tpu_custom_call.1} parent=5 // pred_region
        %s287 = ssub.s32 %s22, 1
        %s288 = sand.u32 %s35, 1
        %s289 = scalar_lea.sflag [#allocation3], %s288
        %s290 = sand.u32 %s35, 1
        %s291 = smul.addr %s290, 8
        %s292 = scalar_lea.vmem [#allocation2], %s291
        // Predicated region
        $region45: #{tpu_custom_call.1} parent=43 // pred_check
          %p293 = pneg %p48
        $region46: #{tpu_custom_call.1} parent=43 // pred_check_branch
          %295 = sbr.rel (%p293) target = $region48
        $region47: #{tpu_custom_call.1} parent=43 // pred_region
          %296 = dma.done %s289, 128
        $region48: #{tpu_custom_call.1} parent=43 // pred_fallthru
          _
        %s297 = sand.u32 %s27, 1
        %s298 = scalar_lea.sflag [#allocation6], %s297
        %s299 = sand.u32 %s61, 1
        %s300 = smul.addr %s299, 8
        %s301 = scalar_lea.vmem [#allocation5], %s300
        // Predicated region
        $region49: #{tpu_custom_call.1} parent=43 // pred_check
          %p302 = pneg %p74
        $region50: #{tpu_custom_call.1} parent=43 // pred_check_branch
          %304 = sbr.rel (%p302) target = $region52
        $region51: #{tpu_custom_call.1} parent=43 // pred_region
          %305 = dma.done %s298, 128
        $region52: #{tpu_custom_call.1} parent=43 // pred_fallthru
          _
        // Predicated region
        $region53: #{tpu_custom_call.1} parent=43 // pred_check
          %p306 = pneg %p95
        $region54: #{tpu_custom_call.1} parent=43 // pred_check_branch
          %308 = sbr.rel (%p306) target = $region56
        $region55: #{tpu_custom_call.1} parent=43 // pred_region
          %309 = dma.done [#allocation6], 512
        $region56: #{tpu_custom_call.1} parent=43 // pred_fallthru
          _
        // Predicated region
        $region57: #{tpu_custom_call.1} parent=43 // pred_check
          %p310 = pneg %p116
        $region58: #{tpu_custom_call.1} parent=43 // pred_check_branch
          %312 = sbr.rel (%p310) target = $region60
        $region59: #{tpu_custom_call.1} parent=43 // pred_region
          %313 = dma.done [#allocation9], 512
        $region60: #{tpu_custom_call.1} parent=43 // pred_fallthru
          _
        // Predicated region
        $region61: #{tpu_custom_call.1} parent=43 // pred_check
          %p314 = pneg %p137
        $region62: #{tpu_custom_call.1} parent=43 // pred_check_branch
          %316 = sbr.rel (%p314) target = $region64
        $region63: #{tpu_custom_call.1} parent=43 // pred_region
          %317 = dma.done [#allocation9], 512
        $region64: #{tpu_custom_call.1} parent=43 // pred_fallthru
          _
        %s318 = sand.u32 %s35, 1
        %s319 = scalar_lea.sflag [#allocation3], %s318
        %s320 = sand.u32 %s35, 1
        %s321 = smul.addr %s320, 8
        %s322 = scalar_lea.vmem [#allocation2], %s321
        %p323 = pneg %p48
        %p324 = pneg %p45
        %s325 = sand.u32 %s27, 1
        %s326 = scalar_lea.sflag [#allocation6], %s325
        %s327 = sand.u32 %s61, 1
        %s328 = smul.addr %s327, 8
        %s329 = scalar_lea.vmem [#allocation5], %s328
        %p330 = pneg %p74
        %p331 = pneg %p71
        %p332 = pneg %p95
        %p333 = pneg %p92
        %p334 = pneg %p116
        %p335 = pneg %p113
        %p336 = pneg %p137
        %p337 = pneg %p134
        %p338 = pneg %p158
        %p339 = pneg %p155
        %p340 = pneg %p184
        %p341 = pneg %p181
        %s342 = sand.u32 %s171, 1
        %s343 = scalar_lea.sflag [#allocation4], %s342
        %s344 = sand.u32 %s171, 1
        %s345 = smul.addr %s344, 8
        %s346 = scalar_lea.vmem [#allocation11], %s345
        %v347 = vld [vmem:[%s292] sm:$0xff]
        %v348 = vld [vmem:[%s301] sm:$0xff]
        %v349 = vld [vmem:[#allocation7] sm:$0xff]
        %v350 = vld [vmem:[#allocation7 + $0x8] sm:$0xff]
        %v351 = vld [vmem:[#allocation7 + $0x10] sm:$0xff]
        %v352 = vld [vmem:[#allocation7 + $0x18] sm:$0xff]
        %vm353 = vcmask 261120
        %v355 = vsel %vm353, %v347, 0
        %357 = vmatprep.subr.mxu0 0.0
        %358 = vmatpush1.msra.mxu0 %v349
        %359 = vmatprep.subr.mxu0 0.0
        %360 = vmatpush1.msra.mxu0 %v350
        %361 = vmatprep.subr.mxu0 0.0
        %362 = vmatpush1.msra.mxu0 %v351
        %363 = vmatprep.subr.mxu0 0.0
        %364 = vmatpush1.msra.mxu0 %v352
        %365 = vmatprep.subr.mxu0 0.0
        %366 = vmatpush1.msra.mxu0 0.0
        %367 = vmatprep.subr.mxu0 0.0
        %368 = vmatpush1.msra.mxu0 0.0
        %369 = vmatprep.subr.mxu0 0.0
        %370 = vmatpush1.msra.mxu0 0.0
        %371 = vmatprep.subr.mxu0 0.0
        %372 = vmatpush1.msra.mxu0 0.0
        %373 = vmatprep.subr.mxu0 0.0
        %374 = vmatpush1.msra.mxu0 0.0
        %375 = vmatprep.subr.mxu0 0.0
        %376 = vmatpush1.msra.mxu0 0.0
        %377 = vmatprep.subr.mxu0 0.0
        %378 = vmatpush1.msra.mxu0 0.0
        %379 = vmatprep.subr.mxu0 0.0
        %380 = vmatpush1.msra.mxu0 0.0
        %381 = vmatprep.subr.mxu0 0.0
        %382 = vmatpush1.msra.mxu0 0.0
        %383 = vmatprep.subr.mxu0 0.0
        %384 = vmatpush1.msra.mxu0 0.0
        %385 = vmatprep.subr.mxu0 0.0
        %386 = vmatpush1.msra.mxu0 0.0
        %387 = vmatprep.subr.mxu0 0.0
        %388 = vmatpush1.msra.mxu0 0.0
        %389 = vmatprep.subr.mxu0 0.0
        %390 = vmatpush1.msra.mxu0 0.0
        %391 = vmatprep.subr.mxu0 0.0
        %392 = vmatpush1.msra.mxu0 0.0
        %393 = vmatprep.subr.mxu0 0.0
        %394 = vmatpush1.msra.mxu0 0.0
        %395 = vmatprep.subr.mxu0 0.0
        %396 = vmatpush1.msra.mxu0 0.0
        %397 = vmatprep.subr.mxu0 0.0
        %398 = vmatpush1.msra.mxu0 0.0
        %399 = vmatprep.subr.mxu0 0.0
        %400 = vmatpush1.msra.mxu0 0.0
        %401 = vmatprep.subr.mxu0 0.0
        %402 = vmatpush1.msra.mxu0 0.0
        %403 = vmatprep.subr.mxu0 0.0
        %404 = vmatpush1.msra.mxu0 0.0
        %405 = vmatprep.subr.mxu0 0.0
        %406 = vmatpush1.msra.mxu0 0.0
        %407 = vmatprep.subr.mxu0 0.0
        %408 = vmatpush1.msra.mxu0 0.0
        %409 = vmatprep.subr.mxu0 0.0
        %410 = vmatpush1.msra.mxu0 0.0
        %411 = vmatprep.subr.mxu0 0.0
        %412 = vmatpush1.msra.mxu0 0.0
        %413 = vmatprep.subr.mxu0 0.0
        %414 = vmatpush1.msra.mxu0 0.0
        %415 = vmatprep.subr.mxu0 0.0
        %416 = vmatpush1.msra.mxu0 0.0
        %417 = vmatprep.subr.mxu0 0.0
        %418 = vmatpush1.msra.mxu0 0.0
        %419 = vmatprep.subr.mxu0 0.0
        %420 = vmatpush1.msra.mxu0 0.0
        %421 = vmatprep.mubr.f32.mxu0 0.0
        %422 = vmatmul.mubr.f32.gmra.mrb[0].mxu0 %v355
        %v423 = vpop.f32.mrb[0].mxu0
        %v424 = vadd.f32 0.0, %v423
        %v425 = vpop.f32.mrb[0].mxu0
        %426 = vdwg.mxu0
        %v427 = vld [vmem:[#allocation8] sm:$0xff]
        %v428 = vld [vmem:[#allocation8 + $0x8] sm:$0xff]
        %v429 = vld [vmem:[#allocation8 + $0x10] sm:$0xff]
        %v430 = vld [vmem:[#allocation8 + $0x18] sm:$0xff]
        %v432 = vsel %vm353, %v348, 0
        %434 = vmatprep.subr.mxu0 0.0
        %435 = vmatpush1.msra.mxu0 %v427
        %436 = vmatprep.subr.mxu0 0.0
        %437 = vmatpush1.msra.mxu0 %v428
        %438 = vmatprep.subr.mxu0 0.0
        %439 = vmatpush1.msra.mxu0 %v429
        %440 = vmatprep.subr.mxu0 0.0
        %441 = vmatpush1.msra.mxu0 %v430
        %442 = vmatprep.subr.mxu0 0.0
        %443 = vmatpush1.msra.mxu0 0.0
        %444 = vmatprep.subr.mxu0 0.0
        %445 = vmatpush1.msra.mxu0 0.0
        %446 = vmatprep.subr.mxu0 0.0
        %447 = vmatpush1.msra.mxu0 0.0
        %448 = vmatprep.subr.mxu0 0.0
        %449 = vmatpush1.msra.mxu0 0.0
        %450 = vmatprep.subr.mxu0 0.0
        %451 = vmatpush1.msra.mxu0 0.0
        %452 = vmatprep.subr.mxu0 0.0
        %453 = vmatpush1.msra.mxu0 0.0
        %454 = vmatprep.subr.mxu0 0.0
        %455 = vmatpush1.msra.mxu0 0.0
        %456 = vmatprep.subr.mxu0 0.0
        %457 = vmatpush1.msra.mxu0 0.0
        %458 = vmatprep.subr.mxu0 0.0
        %459 = vmatpush1.msra.mxu0 0.0
        %460 = vmatprep.subr.mxu0 0.0
        %461 = vmatpush1.msra.mxu0 0.0
        %462 = vmatprep.subr.mxu0 0.0
        %463 = vmatpush1.msra.mxu0 0.0
        %464 = vmatprep.subr.mxu0 0.0
        %465 = vmatpush1.msra.mxu0 0.0
        %466 = vmatprep.subr.mxu0 0.0
        %467 = vmatpush1.msra.mxu0 0.0
        %468 = vmatprep.subr.mxu0 0.0
        %469 = vmatpush1.msra.mxu0 0.0
        %470 = vmatprep.subr.mxu0 0.0
        %471 = vmatpush1.msra.mxu0 0.0
        %472 = vmatprep.subr.mxu0 0.0
        %473 = vmatpush1.msra.mxu0 0.0
        %474 = vmatprep.subr.mxu0 0.0
        %475 = vmatpush1.msra.mxu0 0.0
        %476 = vmatprep.subr.mxu0 0.0
        %477 = vmatpush1.msra.mxu0 0.0
        %478 = vmatprep.subr.mxu0 0.0
        %479 = vmatpush1.msra.mxu0 0.0
        %480 = vmatprep.subr.mxu0 0.0
        %481 = vmatpush1.msra.mxu0 0.0
        %482 = vmatprep.subr.mxu0 0.0
        %483 = vmatpush1.msra.mxu0 0.0
        %484 = vmatprep.subr.mxu0 0.0
        %485 = vmatpush1.msra.mxu0 0.0
        %486 = vmatprep.subr.mxu0 0.0
        %487 = vmatpush1.msra.mxu0 0.0
        %488 = vmatprep.subr.mxu0 0.0
        %489 = vmatpush1.msra.mxu0 0.0
        %490 = vmatprep.subr.mxu0 0.0
        %491 = vmatpush1.msra.mxu0 0.0
        %492 = vmatprep.subr.mxu0 0.0
        %493 = vmatpush1.msra.mxu0 0.0
        %494 = vmatprep.subr.mxu0 0.0
        %495 = vmatpush1.msra.mxu0 0.0
        %496 = vmatprep.subr.mxu0 0.0
        %497 = vmatpush1.msra.mxu0 0.0
        %498 = vmatprep.mubr.f32.mxu0 0.0
        %499 = vmatmul.mubr.f32.gmra.mrb[0].mxu0 %v432
        %v500 = vpop.f32.mrb[0].mxu0
        %v501 = vadd.f32 0.0, %v500
        %v502 = vpop.f32.mrb[0].mxu0
        %503 = vdwg.mxu0
        %505 = vrot.lane.b32.xlu0 %v424, 124
        %v506 = vpop.permute.xlu0 %505
        %507 = vrot.lane.b32.xlu0 %v424, 120
        %v508 = vpop.permute.xlu0 %507
        %509 = vrot.lane.b32.xlu0 %v424, 116
        %v510 = vpop.permute.xlu0 %509
        %511 = vrot.lane.b32.xlu0 %v424, 112
        %v512 = vpop.permute.xlu0 %511
        %513 = vrot.lane.b32.xlu0 %v424, 108
        %v514 = vpop.permute.xlu0 %513
        %515 = vrot.lane.b32.xlu0 %v424, 104
        %v516 = vpop.permute.xlu0 %515
        %517 = vrot.lane.b32.xlu0 %v424, 100
        %v518 = vpop.permute.xlu0 %517
        %520 = vrot.lane.b32.xlu0 %v501, 124
        %v521 = vpop.permute.xlu0 %520
        %522 = vrot.lane.b32.xlu0 %v501, 120
        %v523 = vpop.permute.xlu0 %522
        %524 = vrot.lane.b32.xlu0 %v501, 116
        %v525 = vpop.permute.xlu0 %524
        %526 = vrot.lane.b32.xlu0 %v501, 112
        %v527 = vpop.permute.xlu0 %526
        %528 = vrot.lane.b32.xlu0 %v501, 108
        %v529 = vpop.permute.xlu0 %528
        %530 = vrot.lane.b32.xlu0 %v501, 104
        %v531 = vpop.permute.xlu0 %530
        %532 = vrot.lane.b32.xlu0 %v501, 100
        %v533 = vpop.permute.xlu0 %532
        %vm534 = vcmask 31744
        %v535 = vsel %vm534, %v424, 0
        %v537 = vsel %vm534, %v501, 0
        %539 = vmatprep.subr.mxu0 0.0
        %540 = vmatpush1.xpose.msra.mxu0 %v537
        %541 = vmatprep.subr.mxu0 0.0
        %542 = vmatpush1.xpose.msra.mxu0 0.0
        %543 = vmatprep.subr.mxu0 0.0
        %544 = vmatpush1.xpose.msra.mxu0 0.0
        %545 = vmatprep.subr.mxu0 0.0
        %546 = vmatpush1.xpose.msra.mxu0 0.0
        %547 = vmatprep.subr.mxu0 0.0
        %548 = vmatpush1.xpose.msra.mxu0 0.0
        %549 = vmatprep.subr.mxu0 0.0
        %550 = vmatpush1.xpose.msra.mxu0 0.0
        %551 = vmatprep.subr.mxu0 0.0
        %552 = vmatpush1.xpose.msra.mxu0 0.0
        %553 = vmatprep.subr.mxu0 0.0
        %554 = vmatpush1.xpose.msra.mxu0 0.0
        %555 = vmatprep.subr.mxu0 0.0
        %556 = vmatpush1.xpose.msra.mxu0 0.0
        %557 = vmatprep.subr.mxu0 0.0
        %558 = vmatpush1.xpose.msra.mxu0 0.0
        %559 = vmatprep.subr.mxu0 0.0
        %560 = vmatpush1.xpose.msra.mxu0 0.0
        %561 = vmatprep.subr.mxu0 0.0
        %562 = vmatpush1.xpose.msra.mxu0 0.0
        %563 = vmatprep.subr.mxu0 0.0
        %564 = vmatpush1.xpose.msra.mxu0 0.0
        %565 = vmatprep.subr.mxu0 0.0
        %566 = vmatpush1.xpose.msra.mxu0 0.0
        %567 = vmatprep.subr.mxu0 0.0
        %568 = vmatpush1.xpose.msra.mxu0 0.0
        %569 = vmatprep.subr.mxu0 0.0
        %570 = vmatpush1.xpose.msra.mxu0 0.0
        %571 = vmatprep.subr.mxu0 0.0
        %572 = vmatpush1.xpose.msra.mxu0 0.0
        %573 = vmatprep.subr.mxu0 0.0
        %574 = vmatpush1.xpose.msra.mxu0 0.0
        %575 = vmatprep.subr.mxu0 0.0
        %576 = vmatpush1.xpose.msra.mxu0 0.0
        %577 = vmatprep.subr.mxu0 0.0
        %578 = vmatpush1.xpose.msra.mxu0 0.0
        %579 = vmatprep.subr.mxu0 0.0
        %580 = vmatpush1.xpose.msra.mxu0 0.0
        %581 = vmatprep.subr.mxu0 0.0
        %582 = vmatpush1.xpose.msra.mxu0 0.0
        %583 = vmatprep.subr.mxu0 0.0
        %584 = vmatpush1.xpose.msra.mxu0 0.0
        %585 = vmatprep.subr.mxu0 0.0
        %586 = vmatpush1.xpose.msra.mxu0 0.0
        %587 = vmatprep.subr.mxu0 0.0
        %588 = vmatpush1.xpose.msra.mxu0 0.0
        %589 = vmatprep.subr.mxu0 0.0
        %590 = vmatpush1.xpose.msra.mxu0 0.0
        %591 = vmatprep.subr.mxu0 0.0
        %592 = vmatpush1.xpose.msra.mxu0 0.0
        %593 = vmatprep.subr.mxu0 0.0
        %594 = vmatpush1.xpose.msra.mxu0 0.0
        %595 = vmatprep.subr.mxu0 0.0
        %596 = vmatpush1.xpose.msra.mxu0 0.0
        %597 = vmatprep.subr.mxu0 0.0
        %598 = vmatpush1.xpose.msra.mxu0 0.0
        %599 = vmatprep.subr.mxu0 0.0
        %600 = vmatpush1.xpose.msra.mxu0 0.0
        %601 = vmatprep.subr.mxu0 0.0
        %602 = vmatpush1.xpose.msra.mxu0 0.0
        %603 = vmatprep.mubr.f32.mxu0 0.0
        %604 = vmatmul.mubr.f32.gmra.mrb[0].mxu0 %v535
        %v605 = vpop.f32.mrb[0].mxu0
        %v606 = vadd.f32 0.0, %v605
        %v607 = vpop.f32.mrb[0].mxu0
        %608 = vdwg.mxu0
        %v609 = vsel %vm534, %v506, 0
        %v611 = vsel %vm534, %v521, 0
        %613 = vmatprep.subr.mxu0 0.0
        %614 = vmatpush1.xpose.msra.mxu0 %v611
        %615 = vmatprep.subr.mxu0 0.0
        %616 = vmatpush1.xpose.msra.mxu0 0.0
        %617 = vmatprep.subr.mxu0 0.0
        %618 = vmatpush1.xpose.msra.mxu0 0.0
        %619 = vmatprep.subr.mxu0 0.0
        %620 = vmatpush1.xpose.msra.mxu0 0.0
        %621 = vmatprep.subr.mxu0 0.0
        %622 = vmatpush1.xpose.msra.mxu0 0.0
        %623 = vmatprep.subr.mxu0 0.0
        %624 = vmatpush1.xpose.msra.mxu0 0.0
        %625 = vmatprep.subr.mxu0 0.0
        %626 = vmatpush1.xpose.msra.mxu0 0.0
        %627 = vmatprep.subr.mxu0 0.0
        %628 = vmatpush1.xpose.msra.mxu0 0.0
        %629 = vmatprep.subr.mxu0 0.0
        %630 = vmatpush1.xpose.msra.mxu0 0.0
        %631 = vmatprep.subr.mxu0 0.0
        %632 = vmatpush1.xpose.msra.mxu0 0.0
        %633 = vmatprep.subr.mxu0 0.0
        %634 = vmatpush1.xpose.msra.mxu0 0.0
        %635 = vmatprep.subr.mxu0 0.0
        %636 = vmatpush1.xpose.msra.mxu0 0.0
        %637 = vmatprep.subr.mxu0 0.0
        %638 = vmatpush1.xpose.msra.mxu0 0.0
        %639 = vmatprep.subr.mxu0 0.0
        %640 = vmatpush1.xpose.msra.mxu0 0.0
        %641 = vmatprep.subr.mxu0 0.0
        %642 = vmatpush1.xpose.msra.mxu0 0.0
        %643 = vmatprep.subr.mxu0 0.0
        %644 = vmatpush1.xpose.msra.mxu0 0.0
        %645 = vmatprep.subr.mxu0 0.0
        %646 = vmatpush1.xpose.msra.mxu0 0.0
        %647 = vmatprep.subr.mxu0 0.0
        %648 = vmatpush1.xpose.msra.mxu0 0.0
        %649 = vmatprep.subr.mxu0 0.0
        %650 = vmatpush1.xpose.msra.mxu0 0.0
        %651 = vmatprep.subr.mxu0 0.0
        %652 = vmatpush1.xpose.msra.mxu0 0.0
        %653 = vmatprep.subr.mxu0 0.0
        %654 = vmatpush1.xpose.msra.mxu0 0.0
        %655 = vmatprep.subr.mxu0 0.0
        %656 = vmatpush1.xpose.msra.mxu0 0.0
        %657 = vmatprep.subr.mxu0 0.0
        %658 = vmatpush1.xpose.msra.mxu0 0.0
        %659 = vmatprep.subr.mxu0 0.0
        %660 = vmatpush1.xpose.msra.mxu0 0.0
        %661 = vmatprep.subr.mxu0 0.0
        %662 = vmatpush1.xpose.msra.mxu0 0.0
        %663 = vmatprep.subr.mxu0 0.0
        %664 = vmatpush1.xpose.msra.mxu0 0.0
        %665 = vmatprep.subr.mxu0 0.0
        %666 = vmatpush1.xpose.msra.mxu0 0.0
        %667 = vmatprep.subr.mxu0 0.0
        %668 = vmatpush1.xpose.msra.mxu0 0.0
        %669 = vmatprep.subr.mxu0 0.0
        %670 = vmatpush1.xpose.msra.mxu0 0.0
        %671 = vmatprep.subr.mxu0 0.0
        %672 = vmatpush1.xpose.msra.mxu0 0.0
        %673 = vmatprep.subr.mxu0 0.0
        %674 = vmatpush1.xpose.msra.mxu0 0.0
        %675 = vmatprep.subr.mxu0 0.0
        %676 = vmatpush1.xpose.msra.mxu0 0.0
        %677 = vmatprep.mubr.f32.mxu0 0.0
        %678 = vmatmul.mubr.f32.gmra.mrb[0].mxu0 %v609
        %v679 = vpop.f32.mrb[0].mxu0
        %v680 = vadd.f32 0.0, %v679
        %v681 = vpop.f32.mrb[0].mxu0
        %682 = vdwg.mxu0
        %v683 = vsel %vm534, %v508, 0
        %v685 = vsel %vm534, %v523, 0
        %687 = vmatprep.subr.mxu0 0.0
        %688 = vmatpush1.xpose.msra.mxu0 %v685
        %689 = vmatprep.subr.mxu0 0.0
        %690 = vmatpush1.xpose.msra.mxu0 0.0
        %691 = vmatprep.subr.mxu0 0.0
        %692 = vmatpush1.xpose.msra.mxu0 0.0
        %693 = vmatprep.subr.mxu0 0.0
        %694 = vmatpush1.xpose.msra.mxu0 0.0
        %695 = vmatprep.subr.mxu0 0.0
        %696 = vmatpush1.xpose.msra.mxu0 0.0
        %697 = vmatprep.subr.mxu0 0.0
        %698 = vmatpush1.xpose.msra.mxu0 0.0
        %699 = vmatprep.subr.mxu0 0.0
        %700 = vmatpush1.xpose.msra.mxu0 0.0
        %701 = vmatprep.subr.mxu0 0.0
        %702 = vmatpush1.xpose.msra.mxu0 0.0
        %703 = vmatprep.subr.mxu0 0.0
        %704 = vmatpush1.xpose.msra.mxu0 0.0
        %705 = vmatprep.subr.mxu0 0.0
        %706 = vmatpush1.xpose.msra.mxu0 0.0
        %707 = vmatprep.subr.mxu0 0.0
        %708 = vmatpush1.xpose.msra.mxu0 0.0
        %709 = vmatprep.subr.mxu0 0.0
        %710 = vmatpush1.xpose.msra.mxu0 0.0
        %711 = vmatprep.subr.mxu0 0.0
        %712 = vmatpush1.xpose.msra.mxu0 0.0
        %713 = vmatprep.subr.mxu0 0.0
        %714 = vmatpush1.xpose.msra.mxu0 0.0
        %715 = vmatprep.subr.mxu0 0.0
        %716 = vmatpush1.xpose.msra.mxu0 0.0
        %717 = vmatprep.subr.mxu0 0.0
        %718 = vmatpush1.xpose.msra.mxu0 0.0
        %719 = vmatprep.subr.mxu0 0.0
        %720 = vmatpush1.xpose.msra.mxu0 0.0
        %721 = vmatprep.subr.mxu0 0.0
        %722 = vmatpush1.xpose.msra.mxu0 0.0
        %723 = vmatprep.subr.mxu0 0.0
        %724 = vmatpush1.xpose.msra.mxu0 0.0
        %725 = vmatprep.subr.mxu0 0.0
        %726 = vmatpush1.xpose.msra.mxu0 0.0
        %727 = vmatprep.subr.mxu0 0.0
        %728 = vmatpush1.xpose.msra.mxu0 0.0
        %729 = vmatprep.subr.mxu0 0.0
        %730 = vmatpush1.xpose.msra.mxu0 0.0
        %731 = vmatprep.subr.mxu0 0.0
        %732 = vmatpush1.xpose.msra.mxu0 0.0
        %733 = vmatprep.subr.mxu0 0.0
        %734 = vmatpush1.xpose.msra.mxu0 0.0
        %735 = vmatprep.subr.mxu0 0.0
        %736 = vmatpush1.xpose.msra.mxu0 0.0
        %737 = vmatprep.subr.mxu0 0.0
        %738 = vmatpush1.xpose.msra.mxu0 0.0
        %739 = vmatprep.subr.mxu0 0.0
        %740 = vmatpush1.xpose.msra.mxu0 0.0
        %741 = vmatprep.subr.mxu0 0.0
        %742 = vmatpush1.xpose.msra.mxu0 0.0
        %743 = vmatprep.subr.mxu0 0.0
        %744 = vmatpush1.xpose.msra.mxu0 0.0
        %745 = vmatprep.subr.mxu0 0.0
        %746 = vmatpush1.xpose.msra.mxu0 0.0
        %747 = vmatprep.subr.mxu0 0.0
        %748 = vmatpush1.xpose.msra.mxu0 0.0
        %749 = vmatprep.subr.mxu0 0.0
        %750 = vmatpush1.xpose.msra.mxu0 0.0
        %751 = vmatprep.mubr.f32.mxu0 0.0
        %752 = vmatmul.mubr.f32.gmra.mrb[0].mxu0 %v683
        %v753 = vpop.f32.mrb[0].mxu0
        %v754 = vadd.f32 0.0, %v753
        %v755 = vpop.f32.mrb[0].mxu0
        %756 = vdwg.mxu0
        %v757 = vsel %vm534, %v510, 0
        %v759 = vsel %vm534, %v525, 0
        %761 = vmatprep.subr.mxu0 0.0
        %762 = vmatpush1.xpose.msra.mxu0 %v759
        %763 = vmatprep.subr.mxu0 0.0
        %764 = vmatpush1.xpose.msra.mxu0 0.0
        %765 = vmatprep.subr.mxu0 0.0
        %766 = vmatpush1.xpose.msra.mxu0 0.0
        %767 = vmatprep.subr.mxu0 0.0
        %768 = vmatpush1.xpose.msra.mxu0 0.0
        %769 = vmatprep.subr.mxu0 0.0
        %770 = vmatpush1.xpose.msra.mxu0 0.0
        %771 = vmatprep.subr.mxu0 0.0
        %772 = vmatpush1.xpose.msra.mxu0 0.0
        %773 = vmatprep.subr.mxu0 0.0
        %774 = vmatpush1.xpose.msra.mxu0 0.0
        %775 = vmatprep.subr.mxu0 0.0
        %776 = vmatpush1.xpose.msra.mxu0 0.0
        %777 = vmatprep.subr.mxu0 0.0
        %778 = vmatpush1.xpose.msra.mxu0 0.0
        %779 = vmatprep.subr.mxu0 0.0
        %780 = vmatpush1.xpose.msra.mxu0 0.0
        %781 = vmatprep.subr.mxu0 0.0
        %782 = vmatpush1.xpose.msra.mxu0 0.0
        %783 = vmatprep.subr.mxu0 0.0
        %784 = vmatpush1.xpose.msra.mxu0 0.0
        %785 = vmatprep.subr.mxu0 0.0
        %786 = vmatpush1.xpose.msra.mxu0 0.0
        %787 = vmatprep.subr.mxu0 0.0
        %788 = vmatpush1.xpose.msra.mxu0 0.0
        %789 = vmatprep.subr.mxu0 0.0
        %790 = vmatpush1.xpose.msra.mxu0 0.0
        %791 = vmatprep.subr.mxu0 0.0
        %792 = vmatpush1.xpose.msra.mxu0 0.0
        %793 = vmatprep.subr.mxu0 0.0
        %794 = vmatpush1.xpose.msra.mxu0 0.0
        %795 = vmatprep.subr.mxu0 0.0
        %796 = vmatpush1.xpose.msra.mxu0 0.0
        %797 = vmatprep.subr.mxu0 0.0
        %798 = vmatpush1.xpose.msra.mxu0 0.0
        %799 = vmatprep.subr.mxu0 0.0
        %800 = vmatpush1.xpose.msra.mxu0 0.0
        %801 = vmatprep.subr.mxu0 0.0
        %802 = vmatpush1.xpose.msra.mxu0 0.0
        %803 = vmatprep.subr.mxu0 0.0
        %804 = vmatpush1.xpose.msra.mxu0 0.0
        %805 = vmatprep.subr.mxu0 0.0
        %806 = vmatpush1.xpose.msra.mxu0 0.0
        %807 = vmatprep.subr.mxu0 0.0
        %808 = vmatpush1.xpose.msra.mxu0 0.0
        %809 = vmatprep.subr.mxu0 0.0
        %810 = vmatpush1.xpose.msra.mxu0 0.0
        %811 = vmatprep.subr.mxu0 0.0
        %812 = vmatpush1.xpose.msra.mxu0 0.0
        %813 = vmatprep.subr.mxu0 0.0
        %814 = vmatpush1.xpose.msra.mxu0 0.0
        %815 = vmatprep.subr.mxu0 0.0
        %816 = vmatpush1.xpose.msra.mxu0 0.0
        %817 = vmatprep.subr.mxu0 0.0
        %818 = vmatpush1.xpose.msra.mxu0 0.0
        %819 = vmatprep.subr.mxu0 0.0
        %820 = vmatpush1.xpose.msra.mxu0 0.0
        %821 = vmatprep.subr.mxu0 0.0
        %822 = vmatpush1.xpose.msra.mxu0 0.0
        %823 = vmatprep.subr.mxu0 0.0
        %824 = vmatpush1.xpose.msra.mxu0 0.0
        %825 = vmatprep.mubr.f32.mxu0 0.0
        %826 = vmatmul.mubr.f32.gmra.mrb[0].mxu0 %v757
        %v827 = vpop.f32.mrb[0].mxu0
        %v828 = vadd.f32 0.0, %v827
        %v829 = vpop.f32.mrb[0].mxu0
        %830 = vdwg.mxu0
        %v831 = vsel %vm534, %v512, 0
        %v833 = vsel %vm534, %v527, 0
        %835 = vmatprep.subr.mxu0 0.0
        %836 = vmatpush1.xpose.msra.mxu0 %v833
        %837 = vmatprep.subr.mxu0 0.0
        %838 = vmatpush1.xpose.msra.mxu0 0.0
        %839 = vmatprep.subr.mxu0 0.0
        %840 = vmatpush1.xpose.msra.mxu0 0.0
        %841 = vmatprep.subr.mxu0 0.0
        %842 = vmatpush1.xpose.msra.mxu0 0.0
        %843 = vmatprep.subr.mxu0 0.0
        %844 = vmatpush1.xpose.msra.mxu0 0.0
        %845 = vmatprep.subr.mxu0 0.0
        %846 = vmatpush1.xpose.msra.mxu0 0.0
        %847 = vmatprep.subr.mxu0 0.0
        %848 = vmatpush1.xpose.msra.mxu0 0.0
        %849 = vmatprep.subr.mxu0 0.0
        %850 = vmatpush1.xpose.msra.mxu0 0.0
        %851 = vmatprep.subr.mxu0 0.0
        %852 = vmatpush1.xpose.msra.mxu0 0.0
        %853 = vmatprep.subr.mxu0 0.0
        %854 = vmatpush1.xpose.msra.mxu0 0.0
        %855 = vmatprep.subr.mxu0 0.0
        %856 = vmatpush1.xpose.msra.mxu0 0.0
        %857 = vmatprep.subr.mxu0 0.0
        %858 = vmatpush1.xpose.msra.mxu0 0.0
        %859 = vmatprep.subr.mxu0 0.0
        %860 = vmatpush1.xpose.msra.mxu0 0.0
        %861 = vmatprep.subr.mxu0 0.0
        %862 = vmatpush1.xpose.msra.mxu0 0.0
        %863 = vmatprep.subr.mxu0 0.0
        %864 = vmatpush1.xpose.msra.mxu0 0.0
        %865 = vmatprep.subr.mxu0 0.0
        %866 = vmatpush1.xpose.msra.mxu0 0.0
        %867 = vmatprep.subr.mxu0 0.0
        %868 = vmatpush1.xpose.msra.mxu0 0.0
        %869 = vmatprep.subr.mxu0 0.0
        %870 = vmatpush1.xpose.msra.mxu0 0.0
        %871 = vmatprep.subr.mxu0 0.0
        %872 = vmatpush1.xpose.msra.mxu0 0.0
        %873 = vmatprep.subr.mxu0 0.0
        %874 = vmatpush1.xpose.msra.mxu0 0.0
        %875 = vmatprep.subr.mxu0 0.0
        %876 = vmatpush1.xpose.msra.mxu0 0.0
        %877 = vmatprep.subr.mxu0 0.0
        %878 = vmatpush1.xpose.msra.mxu0 0.0
        %879 = vmatprep.subr.mxu0 0.0
        %880 = vmatpush1.xpose.msra.mxu0 0.0
        %881 = vmatprep.subr.mxu0 0.0
        %882 = vmatpush1.xpose.msra.mxu0 0.0
        %883 = vmatprep.subr.mxu0 0.0
        %884 = vmatpush1.xpose.msra.mxu0 0.0
        %885 = vmatprep.subr.mxu0 0.0
        %886 = vmatpush1.xpose.msra.mxu0 0.0
        %887 = vmatprep.subr.mxu0 0.0
        %888 = vmatpush1.xpose.msra.mxu0 0.0
        %889 = vmatprep.subr.mxu0 0.0
        %890 = vmatpush1.xpose.msra.mxu0 0.0
        %891 = vmatprep.subr.mxu0 0.0
        %892 = vmatpush1.xpose.msra.mxu0 0.0
        %893 = vmatprep.subr.mxu0 0.0
        %894 = vmatpush1.xpose.msra.mxu0 0.0
        %895 = vmatprep.subr.mxu0 0.0
        %896 = vmatpush1.xpose.msra.mxu0 0.0
        %897 = vmatprep.subr.mxu0 0.0
        %898 = vmatpush1.xpose.msra.mxu0 0.0
        %899 = vmatprep.mubr.f32.mxu0 0.0
        %900 = vmatmul.mubr.f32.gmra.mrb[0].mxu0 %v831
        %v901 = vpop.f32.mrb[0].mxu0
        %v902 = vadd.f32 0.0, %v901
        %v903 = vpop.f32.mrb[0].mxu0
        %904 = vdwg.mxu0
        %v905 = vsel %vm534, %v514, 0
        %v907 = vsel %vm534, %v529, 0
        %909 = vmatprep.subr.mxu0 0.0
        %910 = vmatpush1.xpose.msra.mxu0 %v907
        %911 = vmatprep.subr.mxu0 0.0
        %912 = vmatpush1.xpose.msra.mxu0 0.0
        %913 = vmatprep.subr.mxu0 0.0
        %914 = vmatpush1.xpose.msra.mxu0 0.0
        %915 = vmatprep.subr.mxu0 0.0
        %916 = vmatpush1.xpose.msra.mxu0 0.0
        %917 = vmatprep.subr.mxu0 0.0
        %918 = vmatpush1.xpose.msra.mxu0 0.0
        %919 = vmatprep.subr.mxu0 0.0
        %920 = vmatpush1.xpose.msra.mxu0 0.0
        %921 = vmatprep.subr.mxu0 0.0
        %922 = vmatpush1.xpose.msra.mxu0 0.0
        %923 = vmatprep.subr.mxu0 0.0
        %924 = vmatpush1.xpose.msra.mxu0 0.0
        %925 = vmatprep.subr.mxu0 0.0
        %926 = vmatpush1.xpose.msra.mxu0 0.0
        %927 = vmatprep.subr.mxu0 0.0
        %928 = vmatpush1.xpose.msra.mxu0 0.0
        %929 = vmatprep.subr.mxu0 0.0
        %930 = vmatpush1.xpose.msra.mxu0 0.0
        %931 = vmatprep.subr.mxu0 0.0
        %932 = vmatpush1.xpose.msra.mxu0 0.0
        %933 = vmatprep.subr.mxu0 0.0
        %934 = vmatpush1.xpose.msra.mxu0 0.0
        %935 = vmatprep.subr.mxu0 0.0
        %936 = vmatpush1.xpose.msra.mxu0 0.0
        %937 = vmatprep.subr.mxu0 0.0
        %938 = vmatpush1.xpose.msra.mxu0 0.0
        %939 = vmatprep.subr.mxu0 0.0
        %940 = vmatpush1.xpose.msra.mxu0 0.0
        %941 = vmatprep.subr.mxu0 0.0
        %942 = vmatpush1.xpose.msra.mxu0 0.0
        %943 = vmatprep.subr.mxu0 0.0
        %944 = vmatpush1.xpose.msra.mxu0 0.0
        %945 = vmatprep.subr.mxu0 0.0
        %946 = vmatpush1.xpose.msra.mxu0 0.0
        %947 = vmatprep.subr.mxu0 0.0
        %948 = vmatpush1.xpose.msra.mxu0 0.0
        %949 = vmatprep.subr.mxu0 0.0
        %950 = vmatpush1.xpose.msra.mxu0 0.0
        %951 = vmatprep.subr.mxu0 0.0
        %952 = vmatpush1.xpose.msra.mxu0 0.0
        %953 = vmatprep.subr.mxu0 0.0
        %954 = vmatpush1.xpose.msra.mxu0 0.0
        %955 = vmatprep.subr.mxu0 0.0
        %956 = vmatpush1.xpose.msra.mxu0 0.0
        %957 = vmatprep.subr.mxu0 0.0
        %958 = vmatpush1.xpose.msra.mxu0 0.0
        %959 = vmatprep.subr.mxu0 0.0
        %960 = vmatpush1.xpose.msra.mxu0 0.0
        %961 = vmatprep.subr.mxu0 0.0
        %962 = vmatpush1.xpose.msra.mxu0 0.0
        %963 = vmatprep.subr.mxu0 0.0
        %964 = vmatpush1.xpose.msra.mxu0 0.0
        %965 = vmatprep.subr.mxu0 0.0
        %966 = vmatpush1.xpose.msra.mxu0 0.0
        %967 = vmatprep.subr.mxu0 0.0
        %968 = vmatpush1.xpose.msra.mxu0 0.0
        %969 = vmatprep.subr.mxu0 0.0
        %970 = vmatpush1.xpose.msra.mxu0 0.0
        %971 = vmatprep.subr.mxu0 0.0
        %972 = vmatpush1.xpose.msra.mxu0 0.0
        %973 = vmatprep.mubr.f32.mxu0 0.0
        %974 = vmatmul.mubr.f32.gmra.mrb[0].mxu0 %v905
        %v975 = vpop.f32.mrb[0].mxu0
        %v976 = vadd.f32 0.0, %v975
        %v977 = vpop.f32.mrb[0].mxu0
        %978 = vdwg.mxu0
        %v979 = vsel %vm534, %v516, 0
        %v981 = vsel %vm534, %v531, 0
        %983 = vmatprep.subr.mxu0 0.0
        %984 = vmatpush1.xpose.msra.mxu0 %v981
        %985 = vmatprep.subr.mxu0 0.0
        %986 = vmatpush1.xpose.msra.mxu0 0.0
        %987 = vmatprep.subr.mxu0 0.0
        %988 = vmatpush1.xpose.msra.mxu0 0.0
        %989 = vmatprep.subr.mxu0 0.0
        %990 = vmatpush1.xpose.msra.mxu0 0.0
        %991 = vmatprep.subr.mxu0 0.0
        %992 = vmatpush1.xpose.msra.mxu0 0.0
        %993 = vmatprep.subr.mxu0 0.0
        %994 = vmatpush1.xpose.msra.mxu0 0.0
        %995 = vmatprep.subr.mxu0 0.0
        %996 = vmatpush1.xpose.msra.mxu0 0.0
        %997 = vmatprep.subr.mxu0 0.0
        %998 = vmatpush1.xpose.msra.mxu0 0.0
        %999 = vmatprep.subr.mxu0 0.0
        %1000 = vmatpush1.xpose.msra.mxu0 0.0
        %1001 = vmatprep.subr.mxu0 0.0
        %1002 = vmatpush1.xpose.msra.mxu0 0.0
        %1003 = vmatprep.subr.mxu0 0.0
        %1004 = vmatpush1.xpose.msra.mxu0 0.0
        %1005 = vmatprep.subr.mxu0 0.0
        %1006 = vmatpush1.xpose.msra.mxu0 0.0
        %1007 = vmatprep.subr.mxu0 0.0
        %1008 = vmatpush1.xpose.msra.mxu0 0.0
        %1009 = vmatprep.subr.mxu0 0.0
        %1010 = vmatpush1.xpose.msra.mxu0 0.0
        %1011 = vmatprep.subr.mxu0 0.0
        %1012 = vmatpush1.xpose.msra.mxu0 0.0
        %1013 = vmatprep.subr.mxu0 0.0
        %1014 = vmatpush1.xpose.msra.mxu0 0.0
        %1015 = vmatprep.subr.mxu0 0.0
        %1016 = vmatpush1.xpose.msra.mxu0 0.0
        %1017 = vmatprep.subr.mxu0 0.0
        %1018 = vmatpush1.xpose.msra.mxu0 0.0
        %1019 = vmatprep.subr.mxu0 0.0
        %1020 = vmatpush1.xpose.msra.mxu0 0.0
        %1021 = vmatprep.subr.mxu0 0.0
        %1022 = vmatpush1.xpose.msra.mxu0 0.0
        %1023 = vmatprep.subr.mxu0 0.0
        %1024 = vmatpush1.xpose.msra.mxu0 0.0
        %1025 = vmatprep.subr.mxu0 0.0
        %1026 = vmatpush1.xpose.msra.mxu0 0.0
        %1027 = vmatprep.subr.mxu0 0.0
        %1028 = vmatpush1.xpose.msra.mxu0 0.0
        %1029 = vmatprep.subr.mxu0 0.0
        %1030 = vmatpush1.xpose.msra.mxu0 0.0
        %1031 = vmatprep.subr.mxu0 0.0
        %1032 = vmatpush1.xpose.msra.mxu0 0.0
        %1033 = vmatprep.subr.mxu0 0.0
        %1034 = vmatpush1.xpose.msra.mxu0 0.0
        %1035 = vmatprep.subr.mxu0 0.0
        %1036 = vmatpush1.xpose.msra.mxu0 0.0
        %1037 = vmatprep.subr.mxu0 0.0
        %1038 = vmatpush1.xpose.msra.mxu0 0.0
        %1039 = vmatprep.subr.mxu0 0.0
        %1040 = vmatpush1.xpose.msra.mxu0 0.0
        %1041 = vmatprep.subr.mxu0 0.0
        %1042 = vmatpush1.xpose.msra.mxu0 0.0
        %1043 = vmatprep.subr.mxu0 0.0
        %1044 = vmatpush1.xpose.msra.mxu0 0.0
        %1045 = vmatprep.subr.mxu0 0.0
        %1046 = vmatpush1.xpose.msra.mxu0 0.0
        %1047 = vmatprep.mubr.f32.mxu0 0.0
        %1048 = vmatmul.mubr.f32.gmra.mrb[0].mxu0 %v979
        %v1049 = vpop.f32.mrb[0].mxu0
        %v1050 = vadd.f32 0.0, %v1049
        %v1051 = vpop.f32.mrb[0].mxu0
        %1052 = vdwg.mxu0
        %v1053 = vsel %vm534, %v518, 0
        %v1055 = vsel %vm534, %v533, 0
        %1057 = vmatprep.subr.mxu0 0.0
        %1058 = vmatpush1.xpose.msra.mxu0 %v1055
        %1059 = vmatprep.subr.mxu0 0.0
        %1060 = vmatpush1.xpose.msra.mxu0 0.0
        %1061 = vmatprep.subr.mxu0 0.0
        %1062 = vmatpush1.xpose.msra.mxu0 0.0
        %1063 = vmatprep.subr.mxu0 0.0
        %1064 = vmatpush1.xpose.msra.mxu0 0.0
        %1065 = vmatprep.subr.mxu0 0.0
        %1066 = vmatpush1.xpose.msra.mxu0 0.0
        %1067 = vmatprep.subr.mxu0 0.0
        %1068 = vmatpush1.xpose.msra.mxu0 0.0
        %1069 = vmatprep.subr.mxu0 0.0
        %1070 = vmatpush1.xpose.msra.mxu0 0.0
        %1071 = vmatprep.subr.mxu0 0.0
        %1072 = vmatpush1.xpose.msra.mxu0 0.0
        %1073 = vmatprep.subr.mxu0 0.0
        %1074 = vmatpush1.xpose.msra.mxu0 0.0
        %1075 = vmatprep.subr.mxu0 0.0
        %1076 = vmatpush1.xpose.msra.mxu0 0.0
        %1077 = vmatprep.subr.mxu0 0.0
        %1078 = vmatpush1.xpose.msra.mxu0 0.0
        %1079 = vmatprep.subr.mxu0 0.0
        %1080 = vmatpush1.xpose.msra.mxu0 0.0
        %1081 = vmatprep.subr.mxu0 0.0
        %1082 = vmatpush1.xpose.msra.mxu0 0.0
        %1083 = vmatprep.subr.mxu0 0.0
        %1084 = vmatpush1.xpose.msra.mxu0 0.0
        %1085 = vmatprep.subr.mxu0 0.0
        %1086 = vmatpush1.xpose.msra.mxu0 0.0
        %1087 = vmatprep.subr.mxu0 0.0
        %1088 = vmatpush1.xpose.msra.mxu0 0.0
        %1089 = vmatprep.subr.mxu0 0.0
        %1090 = vmatpush1.xpose.msra.mxu0 0.0
        %1091 = vmatprep.subr.mxu0 0.0
        %1092 = vmatpush1.xpose.msra.mxu0 0.0
        %1093 = vmatprep.subr.mxu0 0.0
        %1094 = vmatpush1.xpose.msra.mxu0 0.0
        %1095 = vmatprep.subr.mxu0 0.0
        %1096 = vmatpush1.xpose.msra.mxu0 0.0
        %1097 = vmatprep.subr.mxu0 0.0
        %1098 = vmatpush1.xpose.msra.mxu0 0.0
        %1099 = vmatprep.subr.mxu0 0.0
        %1100 = vmatpush1.xpose.msra.mxu0 0.0
        %1101 = vmatprep.subr.mxu0 0.0
        %1102 = vmatpush1.xpose.msra.mxu0 0.0
        %1103 = vmatprep.subr.mxu0 0.0
        %1104 = vmatpush1.xpose.msra.mxu0 0.0
        %1105 = vmatprep.subr.mxu0 0.0
        %1106 = vmatpush1.xpose.msra.mxu0 0.0
        %1107 = vmatprep.subr.mxu0 0.0
        %1108 = vmatpush1.xpose.msra.mxu0 0.0
        %1109 = vmatprep.subr.mxu0 0.0
        %1110 = vmatpush1.xpose.msra.mxu0 0.0
        %1111 = vmatprep.subr.mxu0 0.0
        %1112 = vmatpush1.xpose.msra.mxu0 0.0
        %1113 = vmatprep.subr.mxu0 0.0
        %1114 = vmatpush1.xpose.msra.mxu0 0.0
        %1115 = vmatprep.subr.mxu0 0.0
        %1116 = vmatpush1.xpose.msra.mxu0 0.0
        %1117 = vmatprep.subr.mxu0 0.0
        %1118 = vmatpush1.xpose.msra.mxu0 0.0
        %1119 = vmatprep.subr.mxu0 0.0
        %1120 = vmatpush1.xpose.msra.mxu0 0.0
        %1121 = vmatprep.mubr.f32.mxu0 0.0
        %1122 = vmatmul.mubr.f32.gmra.mrb[0].mxu0 %v1053
        %v1123 = vpop.f32.mrb[0].mxu0
        %v1124 = vadd.f32 0.0, %v1123
        %v1125 = vpop.f32.mrb[0].mxu0
        %1126 = vdwg.mxu0
        %vm1127 = vcmask 64512
        %v1128 = vsel %vm1127, %v606, -inf
        %1129 = vmax.xlane.f32.xlu0 %v1128
        %v1130 = vpop.xlane.xlu0 %1129
        %v1131 = vsel %vm1127, %v680, -inf
        %1132 = vmax.xlane.f32.xlu0 %v1131
        %v1133 = vpop.xlane.xlu0 %1132
        %v1134 = vsel %vm1127, %v754, -inf
        %1135 = vmax.xlane.f32.xlu0 %v1134
        %v1136 = vpop.xlane.xlu0 %1135
        %v1137 = vsel %vm1127, %v828, -inf
        %1138 = vmax.xlane.f32.xlu0 %v1137
        %v1139 = vpop.xlane.xlu0 %1138
        %v1140 = vsel %vm1127, %v902, -inf
        %1141 = vmax.xlane.f32.xlu0 %v1140
        %v1142 = vpop.xlane.xlu0 %1141
        %v1143 = vsel %vm1127, %v976, -inf
        %1144 = vmax.xlane.f32.xlu0 %v1143
        %v1145 = vpop.xlane.xlu0 %1144
        %v1146 = vsel %vm1127, %v1050, -inf
        %1147 = vmax.xlane.f32.xlu0 %v1146
        %v1148 = vpop.xlane.xlu0 %1147
        %v1149 = vsel %vm1127, %v1124, -inf
        %1150 = vmax.xlane.f32.xlu0 %v1149
        %v1151 = vpop.xlane.xlu0 %1150
        %v1152 = vsub.f32 %v606, %v1130
        %v1153 = vsub.f32 %v680, %v1133
        %v1154 = vsub.f32 %v754, %v1136
        %v1155 = vsub.f32 %v828, %v1139
        %v1156 = vsub.f32 %v902, %v1142
        %v1157 = vsub.f32 %v976, %v1145
        %v1158 = vsub.f32 %v1050, %v1148
        %v1159 = vsub.f32 %v1124, %v1151
        %v1160 = vmul.f32 %v1152, 1.442695
        %v1161 = vpow.pop %v1160
        %v1162 = vmul.f32 %v1153, 1.442695
        %v1163 = vpow.pop %v1162
        %v1164 = vmul.f32 %v1154, 1.442695
        %v1165 = vpow.pop %v1164
        %v1166 = vmul.f32 %v1155, 1.442695
        %v1167 = vpow.pop %v1166
        %v1168 = vmul.f32 %v1156, 1.442695
        %v1169 = vpow.pop %v1168
        %v1170 = vmul.f32 %v1157, 1.442695
        %v1171 = vpow.pop %v1170
        %v1172 = vmul.f32 %v1158, 1.442695
        %v1173 = vpow.pop %v1172
        %v1174 = vmul.f32 %v1159, 1.442695
        %v1175 = vpow.pop %v1174
        %v1176 = vsel %vm1127, %v1161, 0.0
        %1177 = vadd.xlane.f32.xlu0 %v1176
        %v1178 = vpop.xlane.xlu0 %1177
        %v1179 = vsel %vm1127, %v1163, 0.0
        %1180 = vadd.xlane.f32.xlu0 %v1179
        %v1181 = vpop.xlane.xlu0 %1180
        %v1182 = vsel %vm1127, %v1165, 0.0
        %1183 = vadd.xlane.f32.xlu0 %v1182
        %v1184 = vpop.xlane.xlu0 %1183
        %v1185 = vsel %vm1127, %v1167, 0.0
        %1186 = vadd.xlane.f32.xlu0 %v1185
        %v1187 = vpop.xlane.xlu0 %1186
        %v1188 = vsel %vm1127, %v1169, 0.0
        %1189 = vadd.xlane.f32.xlu0 %v1188
        %v1190 = vpop.xlane.xlu0 %1189
        %v1191 = vsel %vm1127, %v1171, 0.0
        %1192 = vadd.xlane.f32.xlu0 %v1191
        %v1193 = vpop.xlane.xlu0 %1192
        %v1194 = vsel %vm1127, %v1173, 0.0
        %1195 = vadd.xlane.f32.xlu0 %v1194
        %v1196 = vpop.xlane.xlu0 %1195
        %v1197 = vsel %vm1127, %v1175, 0.0
        %1198 = vadd.xlane.f32.xlu0 %v1197
        %v1199 = vpop.xlane.xlu0 %1198
        %v1200 = vrcp.pop %v1178
        %v1201 = vrcp.pop %v1181
        %v1202 = vrcp.pop %v1184
        %v1203 = vrcp.pop %v1187
        %v1204 = vrcp.pop %v1190
        %v1205 = vrcp.pop %v1193
        %v1206 = vrcp.pop %v1196
        %v1207 = vrcp.pop %v1199
        %v1208 = vmul.f32 %v1161, %v1200
        %v1209 = vmul.f32 %v1163, %v1201
        %v1210 = vmul.f32 %v1165, %v1202
        %v1211 = vmul.f32 %v1167, %v1203
        %v1212 = vmul.f32 %v1169, %v1204
        %v1213 = vmul.f32 %v1171, %v1205
        %v1214 = vmul.f32 %v1173, %v1206
        %v1215 = vmul.f32 %v1175, %v1207
        %1216 = vrot.lane.b32.xlu0 %v501, 96
        %v1217 = vpop.permute.xlu0 %1216
        %v1220 = vsel %vm1127, %v1208, 0
        %1222 = vmatprep.subr.mxu0 0.0
        %1223 = vmatpush1.msra.mxu0 %v1217
        %1224 = vmatprep.subr.mxu0 0.0
        %1225 = vmatpush1.msra.mxu0 0.0
        %1226 = vmatprep.subr.mxu0 0.0
        %1227 = vmatpush1.msra.mxu0 0.0
        %1228 = vmatprep.subr.mxu0 0.0
        %1229 = vmatpush1.msra.mxu0 0.0
        %1230 = vmatprep.subr.mxu0 0.0
        %1231 = vmatpush1.msra.mxu0 0.0
        %1232 = vmatprep.subr.mxu0 0.0
        %1233 = vmatpush1.msra.mxu0 0.0
        %1234 = vmatprep.subr.mxu0 0.0
        %1235 = vmatpush1.msra.mxu0 0.0
        %1236 = vmatprep.subr.mxu0 0.0
        %1237 = vmatpush1.msra.mxu0 0.0
        %1238 = vmatprep.subr.mxu0 0.0
        %1239 = vmatpush1.msra.mxu0 0.0
        %1240 = vmatprep.subr.mxu0 0.0
        %1241 = vmatpush1.msra.mxu0 0.0
        %1242 = vmatprep.subr.mxu0 0.0
        %1243 = vmatpush1.msra.mxu0 0.0
        %1244 = vmatprep.subr.mxu0 0.0
        %1245 = vmatpush1.msra.mxu0 0.0
        %1246 = vmatprep.subr.mxu0 0.0
        %1247 = vmatpush1.msra.mxu0 0.0
        %1248 = vmatprep.subr.mxu0 0.0
        %1249 = vmatpush1.msra.mxu0 0.0
        %1250 = vmatprep.subr.mxu0 0.0
        %1251 = vmatpush1.msra.mxu0 0.0
        %1252 = vmatprep.subr.mxu0 0.0
        %1253 = vmatpush1.msra.mxu0 0.0
        %1254 = vmatprep.subr.mxu0 0.0
        %1255 = vmatpush1.msra.mxu0 0.0
        %1256 = vmatprep.subr.mxu0 0.0
        %1257 = vmatpush1.msra.mxu0 0.0
        %1258 = vmatprep.subr.mxu0 0.0
        %1259 = vmatpush1.msra.mxu0 0.0
        %1260 = vmatprep.subr.mxu0 0.0
        %1261 = vmatpush1.msra.mxu0 0.0
        %1262 = vmatprep.subr.mxu0 0.0
        %1263 = vmatpush1.msra.mxu0 0.0
        %1264 = vmatprep.subr.mxu0 0.0
        %1265 = vmatpush1.msra.mxu0 0.0
        %1266 = vmatprep.subr.mxu0 0.0
        %1267 = vmatpush1.msra.mxu0 0.0
        %1268 = vmatprep.subr.mxu0 0.0
        %1269 = vmatpush1.msra.mxu0 0.0
        %1270 = vmatprep.subr.mxu0 0.0
        %1271 = vmatpush1.msra.mxu0 0.0
        %1272 = vmatprep.subr.mxu0 0.0
        %1273 = vmatpush1.msra.mxu0 0.0
        %1274 = vmatprep.subr.mxu0 0.0
        %1275 = vmatpush1.msra.mxu0 0.0
        %1276 = vmatprep.subr.mxu0 0.0
        %1277 = vmatpush1.msra.mxu0 0.0
        %1278 = vmatprep.subr.mxu0 0.0
        %1279 = vmatpush1.msra.mxu0 0.0
        %1280 = vmatprep.subr.mxu0 0.0
        %1281 = vmatpush1.msra.mxu0 0.0
        %1282 = vmatprep.subr.mxu0 0.0
        %1283 = vmatpush1.msra.mxu0 0.0
        %1284 = vmatprep.subr.mxu0 0.0
        %1285 = vmatpush1.msra.mxu0 0.0
        %1286 = vmatprep.mubr.f32.mxu0 0.0
        %1287 = vmatmul.mubr.f32.gmra.mrb[0].mxu0 %v1220
        %v1288 = vpop.f32.mrb[0].mxu0
        %v1289 = vadd.f32 0.0, %v1288
        %v1290 = vpop.f32.mrb[0].mxu0
        %1291 = vdwg.mxu0
        %1292 = vrot.lane.b32.xlu0 %v521, 96
        %v1293 = vpop.permute.xlu0 %1292
        %v1296 = vsel %vm1127, %v1209, 0
        %1298 = vmatprep.subr.mxu0 0.0
        %1299 = vmatpush1.msra.mxu0 %v1293
        %1300 = vmatprep.subr.mxu0 0.0
        %1301 = vmatpush1.msra.mxu0 0.0
        %1302 = vmatprep.subr.mxu0 0.0
        %1303 = vmatpush1.msra.mxu0 0.0
        %1304 = vmatprep.subr.mxu0 0.0
        %1305 = vmatpush1.msra.mxu0 0.0
        %1306 = vmatprep.subr.mxu0 0.0
        %1307 = vmatpush1.msra.mxu0 0.0
        %1308 = vmatprep.subr.mxu0 0.0
        %1309 = vmatpush1.msra.mxu0 0.0
        %1310 = vmatprep.subr.mxu0 0.0
        %1311 = vmatpush1.msra.mxu0 0.0
        %1312 = vmatprep.subr.mxu0 0.0
        %1313 = vmatpush1.msra.mxu0 0.0
        %1314 = vmatprep.subr.mxu0 0.0
        %1315 = vmatpush1.msra.mxu0 0.0
        %1316 = vmatprep.subr.mxu0 0.0
        %1317 = vmatpush1.msra.mxu0 0.0
        %1318 = vmatprep.subr.mxu0 0.0
        %1319 = vmatpush1.msra.mxu0 0.0
        %1320 = vmatprep.subr.mxu0 0.0
        %1321 = vmatpush1.msra.mxu0 0.0
        %1322 = vmatprep.subr.mxu0 0.0
        %1323 = vmatpush1.msra.mxu0 0.0
        %1324 = vmatprep.subr.mxu0 0.0
        %1325 = vmatpush1.msra.mxu0 0.0
        %1326 = vmatprep.subr.mxu0 0.0
        %1327 = vmatpush1.msra.mxu0 0.0
        %1328 = vmatprep.subr.mxu0 0.0
        %1329 = vmatpush1.msra.mxu0 0.0
        %1330 = vmatprep.subr.mxu0 0.0
        %1331 = vmatpush1.msra.mxu0 0.0
        %1332 = vmatprep.subr.mxu0 0.0
        %1333 = vmatpush1.msra.mxu0 0.0
        %1334 = vmatprep.subr.mxu0 0.0
        %1335 = vmatpush1.msra.mxu0 0.0
        %1336 = vmatprep.subr.mxu0 0.0
        %1337 = vmatpush1.msra.mxu0 0.0
        %1338 = vmatprep.subr.mxu0 0.0
        %1339 = vmatpush1.msra.mxu0 0.0
        %1340 = vmatprep.subr.mxu0 0.0
        %1341 = vmatpush1.msra.mxu0 0.0
        %1342 = vmatprep.subr.mxu0 0.0
        %1343 = vmatpush1.msra.mxu0 0.0
        %1344 = vmatprep.subr.mxu0 0.0
        %1345 = vmatpush1.msra.mxu0 0.0
        %1346 = vmatprep.subr.mxu0 0.0
        %1347 = vmatpush1.msra.mxu0 0.0
        %1348 = vmatprep.subr.mxu0 0.0
        %1349 = vmatpush1.msra.mxu0 0.0
        %1350 = vmatprep.subr.mxu0 0.0
        %1351 = vmatpush1.msra.mxu0 0.0
        %1352 = vmatprep.subr.mxu0 0.0
        %1353 = vmatpush1.msra.mxu0 0.0
        %1354 = vmatprep.subr.mxu0 0.0
        %1355 = vmatpush1.msra.mxu0 0.0
        %1356 = vmatprep.subr.mxu0 0.0
        %1357 = vmatpush1.msra.mxu0 0.0
        %1358 = vmatprep.subr.mxu0 0.0
        %1359 = vmatpush1.msra.mxu0 0.0
        %1360 = vmatprep.subr.mxu0 0.0
        %1361 = vmatpush1.msra.mxu0 0.0
        %1362 = vmatprep.mubr.f32.mxu0 0.0
        %1363 = vmatmul.mubr.f32.gmra.mrb[0].mxu0 %v1296
        %v1364 = vpop.f32.mrb[0].mxu0
        %v1365 = vadd.f32 0.0, %v1364
        %v1366 = vpop.f32.mrb[0].mxu0
        %1367 = vdwg.mxu0
        %1368 = vrot.lane.b32.xlu0 %v523, 96
        %v1369 = vpop.permute.xlu0 %1368
        %v1372 = vsel %vm1127, %v1210, 0
        %1374 = vmatprep.subr.mxu0 0.0
        %1375 = vmatpush1.msra.mxu0 %v1369
        %1376 = vmatprep.subr.mxu0 0.0
        %1377 = vmatpush1.msra.mxu0 0.0
        %1378 = vmatprep.subr.mxu0 0.0
        %1379 = vmatpush1.msra.mxu0 0.0
        %1380 = vmatprep.subr.mxu0 0.0
        %1381 = vmatpush1.msra.mxu0 0.0
        %1382 = vmatprep.subr.mxu0 0.0
        %1383 = vmatpush1.msra.mxu0 0.0
        %1384 = vmatprep.subr.mxu0 0.0
        %1385 = vmatpush1.msra.mxu0 0.0
        %1386 = vmatprep.subr.mxu0 0.0
        %1387 = vmatpush1.msra.mxu0 0.0
        %1388 = vmatprep.subr.mxu0 0.0
        %1389 = vmatpush1.msra.mxu0 0.0
        %1390 = vmatprep.subr.mxu0 0.0
        %1391 = vmatpush1.msra.mxu0 0.0
        %1392 = vmatprep.subr.mxu0 0.0
        %1393 = vmatpush1.msra.mxu0 0.0
        %1394 = vmatprep.subr.mxu0 0.0
        %1395 = vmatpush1.msra.mxu0 0.0
        %1396 = vmatprep.subr.mxu0 0.0
        %1397 = vmatpush1.msra.mxu0 0.0
        %1398 = vmatprep.subr.mxu0 0.0
        %1399 = vmatpush1.msra.mxu0 0.0
        %1400 = vmatprep.subr.mxu0 0.0
        %1401 = vmatpush1.msra.mxu0 0.0
        %1402 = vmatprep.subr.mxu0 0.0
        %1403 = vmatpush1.msra.mxu0 0.0
        %1404 = vmatprep.subr.mxu0 0.0
        %1405 = vmatpush1.msra.mxu0 0.0
        %1406 = vmatprep.subr.mxu0 0.0
        %1407 = vmatpush1.msra.mxu0 0.0
        %1408 = vmatprep.subr.mxu0 0.0
        %1409 = vmatpush1.msra.mxu0 0.0
        %1410 = vmatprep.subr.mxu0 0.0
        %1411 = vmatpush1.msra.mxu0 0.0
        %1412 = vmatprep.subr.mxu0 0.0
        %1413 = vmatpush1.msra.mxu0 0.0
        %1414 = vmatprep.subr.mxu0 0.0
        %1415 = vmatpush1.msra.mxu0 0.0
        %1416 = vmatprep.subr.mxu0 0.0
        %1417 = vmatpush1.msra.mxu0 0.0
        %1418 = vmatprep.subr.mxu0 0.0
        %1419 = vmatpush1.msra.mxu0 0.0
        %1420 = vmatprep.subr.mxu0 0.0
        %1421 = vmatpush1.msra.mxu0 0.0
        %1422 = vmatprep.subr.mxu0 0.0
        %1423 = vmatpush1.msra.mxu0 0.0
        %1424 = vmatprep.subr.mxu0 0.0
        %1425 = vmatpush1.msra.mxu0 0.0
        %1426 = vmatprep.subr.mxu0 0.0
        %1427 = vmatpush1.msra.mxu0 0.0
        %1428 = vmatprep.subr.mxu0 0.0
        %1429 = vmatpush1.msra.mxu0 0.0
        %1430 = vmatprep.subr.mxu0 0.0
        %1431 = vmatpush1.msra.mxu0 0.0
        %1432 = vmatprep.subr.mxu0 0.0
        %1433 = vmatpush1.msra.mxu0 0.0
        %1434 = vmatprep.subr.mxu0 0.0
        %1435 = vmatpush1.msra.mxu0 0.0
        %1436 = vmatprep.subr.mxu0 0.0
        %1437 = vmatpush1.msra.mxu0 0.0
        %1438 = vmatprep.mubr.f32.mxu0 0.0
        %1439 = vmatmul.mubr.f32.gmra.mrb[0].mxu0 %v1372
        %v1440 = vpop.f32.mrb[0].mxu0
        %v1441 = vadd.f32 0.0, %v1440
        %v1442 = vpop.f32.mrb[0].mxu0
        %1443 = vdwg.mxu0
        %1444 = vrot.lane.b32.xlu0 %v525, 96
        %v1445 = vpop.permute.xlu0 %1444
        %v1448 = vsel %vm1127, %v1211, 0
        %1450 = vmatprep.subr.mxu0 0.0
        %1451 = vmatpush1.msra.mxu0 %v1445
        %1452 = vmatprep.subr.mxu0 0.0
        %1453 = vmatpush1.msra.mxu0 0.0
        %1454 = vmatprep.subr.mxu0 0.0
        %1455 = vmatpush1.msra.mxu0 0.0
        %1456 = vmatprep.subr.mxu0 0.0
        %1457 = vmatpush1.msra.mxu0 0.0
        %1458 = vmatprep.subr.mxu0 0.0
        %1459 = vmatpush1.msra.mxu0 0.0
        %1460 = vmatprep.subr.mxu0 0.0
        %1461 = vmatpush1.msra.mxu0 0.0
        %1462 = vmatprep.subr.mxu0 0.0
        %1463 = vmatpush1.msra.mxu0 0.0
        %1464 = vmatprep.subr.mxu0 0.0
        %1465 = vmatpush1.msra.mxu0 0.0
        %1466 = vmatprep.subr.mxu0 0.0
        %1467 = vmatpush1.msra.mxu0 0.0
        %1468 = vmatprep.subr.mxu0 0.0
        %1469 = vmatpush1.msra.mxu0 0.0
        %1470 = vmatprep.subr.mxu0 0.0
        %1471 = vmatpush1.msra.mxu0 0.0
        %1472 = vmatprep.subr.mxu0 0.0
        %1473 = vmatpush1.msra.mxu0 0.0
        %1474 = vmatprep.subr.mxu0 0.0
        %1475 = vmatpush1.msra.mxu0 0.0
        %1476 = vmatprep.subr.mxu0 0.0
        %1477 = vmatpush1.msra.mxu0 0.0
        %1478 = vmatprep.subr.mxu0 0.0
        %1479 = vmatpush1.msra.mxu0 0.0
        %1480 = vmatprep.subr.mxu0 0.0
        %1481 = vmatpush1.msra.mxu0 0.0
        %1482 = vmatprep.subr.mxu0 0.0
        %1483 = vmatpush1.msra.mxu0 0.0
        %1484 = vmatprep.subr.mxu0 0.0
        %1485 = vmatpush1.msra.mxu0 0.0
        %1486 = vmatprep.subr.mxu0 0.0
        %1487 = vmatpush1.msra.mxu0 0.0
        %1488 = vmatprep.subr.mxu0 0.0
        %1489 = vmatpush1.msra.mxu0 0.0
        %1490 = vmatprep.subr.mxu0 0.0
        %1491 = vmatpush1.msra.mxu0 0.0
        %1492 = vmatprep.subr.mxu0 0.0
        %1493 = vmatpush1.msra.mxu0 0.0
        %1494 = vmatprep.subr.mxu0 0.0
        %1495 = vmatpush1.msra.mxu0 0.0
        %1496 = vmatprep.subr.mxu0 0.0
        %1497 = vmatpush1.msra.mxu0 0.0
        %1498 = vmatprep.subr.mxu0 0.0
        %1499 = vmatpush1.msra.mxu0 0.0
        %1500 = vmatprep.subr.mxu0 0.0
        %1501 = vmatpush1.msra.mxu0 0.0
        %1502 = vmatprep.subr.mxu0 0.0
        %1503 = vmatpush1.msra.mxu0 0.0
        %1504 = vmatprep.subr.mxu0 0.0
        %1505 = vmatpush1.msra.mxu0 0.0
        %1506 = vmatprep.subr.mxu0 0.0
        %1507 = vmatpush1.msra.mxu0 0.0
        %1508 = vmatprep.subr.mxu0 0.0
        %1509 = vmatpush1.msra.mxu0 0.0
        %1510 = vmatprep.subr.mxu0 0.0
        %1511 = vmatpush1.msra.mxu0 0.0
        %1512 = vmatprep.subr.mxu0 0.0
        %1513 = vmatpush1.msra.mxu0 0.0
        %1514 = vmatprep.mubr.f32.mxu0 0.0
        %1515 = vmatmul.mubr.f32.gmra.mrb[0].mxu0 %v1448
        %v1516 = vpop.f32.mrb[0].mxu0
        %v1517 = vadd.f32 0.0, %v1516
        %v1518 = vpop.f32.mrb[0].mxu0
        %1519 = vdwg.mxu0
        %1520 = vrot.lane.b32.xlu0 %v527, 96
        %v1521 = vpop.permute.xlu0 %1520
        %v1524 = vsel %vm1127, %v1212, 0
        %1526 = vmatprep.subr.mxu0 0.0
        %1527 = vmatpush1.msra.mxu0 %v1521
        %1528 = vmatprep.subr.mxu0 0.0
        %1529 = vmatpush1.msra.mxu0 0.0
        %1530 = vmatprep.subr.mxu0 0.0
        %1531 = vmatpush1.msra.mxu0 0.0
        %1532 = vmatprep.subr.mxu0 0.0
        %1533 = vmatpush1.msra.mxu0 0.0
        %1534 = vmatprep.subr.mxu0 0.0
        %1535 = vmatpush1.msra.mxu0 0.0
        %1536 = vmatprep.subr.mxu0 0.0
        %1537 = vmatpush1.msra.mxu0 0.0
        %1538 = vmatprep.subr.mxu0 0.0
        %1539 = vmatpush1.msra.mxu0 0.0
        %1540 = vmatprep.subr.mxu0 0.0
        %1541 = vmatpush1.msra.mxu0 0.0
        %1542 = vmatprep.subr.mxu0 0.0
        %1543 = vmatpush1.msra.mxu0 0.0
        %1544 = vmatprep.subr.mxu0 0.0
        %1545 = vmatpush1.msra.mxu0 0.0
        %1546 = vmatprep.subr.mxu0 0.0
        %1547 = vmatpush1.msra.mxu0 0.0
        %1548 = vmatprep.subr.mxu0 0.0
        %1549 = vmatpush1.msra.mxu0 0.0
        %1550 = vmatprep.subr.mxu0 0.0
        %1551 = vmatpush1.msra.mxu0 0.0
        %1552 = vmatprep.subr.mxu0 0.0
        %1553 = vmatpush1.msra.mxu0 0.0
        %1554 = vmatprep.subr.mxu0 0.0
        %1555 = vmatpush1.msra.mxu0 0.0
        %1556 = vmatprep.subr.mxu0 0.0
        %1557 = vmatpush1.msra.mxu0 0.0
        %1558 = vmatprep.subr.mxu0 0.0
        %1559 = vmatpush1.msra.mxu0 0.0
        %1560 = vmatprep.subr.mxu0 0.0
        %1561 = vmatpush1.msra.mxu0 0.0
        %1562 = vmatprep.subr.mxu0 0.0
        %1563 = vmatpush1.msra.mxu0 0.0
        %1564 = vmatprep.subr.mxu0 0.0
        %1565 = vmatpush1.msra.mxu0 0.0
        %1566 = vmatprep.subr.mxu0 0.0
        %1567 = vmatpush1.msra.mxu0 0.0
        %1568 = vmatprep.subr.mxu0 0.0
        %1569 = vmatpush1.msra.mxu0 0.0
        %1570 = vmatprep.subr.mxu0 0.0
        %1571 = vmatpush1.msra.mxu0 0.0
        %1572 = vmatprep.subr.mxu0 0.0
        %1573 = vmatpush1.msra.mxu0 0.0
        %1574 = vmatprep.subr.mxu0 0.0
        %1575 = vmatpush1.msra.mxu0 0.0
        %1576 = vmatprep.subr.mxu0 0.0
        %1577 = vmatpush1.msra.mxu0 0.0
        %1578 = vmatprep.subr.mxu0 0.0
        %1579 = vmatpush1.msra.mxu0 0.0
        %1580 = vmatprep.subr.mxu0 0.0
        %1581 = vmatpush1.msra.mxu0 0.0
        %1582 = vmatprep.subr.mxu0 0.0
        %1583 = vmatpush1.msra.mxu0 0.0
        %1584 = vmatprep.subr.mxu0 0.0
        %1585 = vmatpush1.msra.mxu0 0.0
        %1586 = vmatprep.subr.mxu0 0.0
        %1587 = vmatpush1.msra.mxu0 0.0
        %1588 = vmatprep.subr.mxu0 0.0
        %1589 = vmatpush1.msra.mxu0 0.0
        %1590 = vmatprep.mubr.f32.mxu0 0.0
        %1591 = vmatmul.mubr.f32.gmra.mrb[0].mxu0 %v1524
        %v1592 = vpop.f32.mrb[0].mxu0
        %v1593 = vadd.f32 0.0, %v1592
        %v1594 = vpop.f32.mrb[0].mxu0
        %1595 = vdwg.mxu0
        %1596 = vrot.lane.b32.xlu0 %v529, 96
        %v1597 = vpop.permute.xlu0 %1596
        %v1600 = vsel %vm1127, %v1213, 0
        %1602 = vmatprep.subr.mxu0 0.0
        %1603 = vmatpush1.msra.mxu0 %v1597
        %1604 = vmatprep.subr.mxu0 0.0
        %1605 = vmatpush1.msra.mxu0 0.0
        %1606 = vmatprep.subr.mxu0 0.0
        %1607 = vmatpush1.msra.mxu0 0.0
        %1608 = vmatprep.subr.mxu0 0.0
        %1609 = vmatpush1.msra.mxu0 0.0
        %1610 = vmatprep.subr.mxu0 0.0
        %1611 = vmatpush1.msra.mxu0 0.0
        %1612 = vmatprep.subr.mxu0 0.0
        %1613 = vmatpush1.msra.mxu0 0.0
        %1614 = vmatprep.subr.mxu0 0.0
        %1615 = vmatpush1.msra.mxu0 0.0
        %1616 = vmatprep.subr.mxu0 0.0
        %1617 = vmatpush1.msra.mxu0 0.0
        %1618 = vmatprep.subr.mxu0 0.0
        %1619 = vmatpush1.msra.mxu0 0.0
        %1620 = vmatprep.subr.mxu0 0.0
        %1621 = vmatpush1.msra.mxu0 0.0
        %1622 = vmatprep.subr.mxu0 0.0
        %1623 = vmatpush1.msra.mxu0 0.0
        %1624 = vmatprep.subr.mxu0 0.0
        %1625 = vmatpush1.msra.mxu0 0.0
        %1626 = vmatprep.subr.mxu0 0.0
        %1627 = vmatpush1.msra.mxu0 0.0
        %1628 = vmatprep.subr.mxu0 0.0
        %1629 = vmatpush1.msra.mxu0 0.0
        %1630 = vmatprep.subr.mxu0 0.0
        %1631 = vmatpush1.msra.mxu0 0.0
        %1632 = vmatprep.subr.mxu0 0.0
        %1633 = vmatpush1.msra.mxu0 0.0
        %1634 = vmatprep.subr.mxu0 0.0
        %1635 = vmatpush1.msra.mxu0 0.0
        %1636 = vmatprep.subr.mxu0 0.0
        %1637 = vmatpush1.msra.mxu0 0.0
        %1638 = vmatprep.subr.mxu0 0.0
        %1639 = vmatpush1.msra.mxu0 0.0
        %1640 = vmatprep.subr.mxu0 0.0
        %1641 = vmatpush1.msra.mxu0 0.0
        %1642 = vmatprep.subr.mxu0 0.0
        %1643 = vmatpush1.msra.mxu0 0.0
        %1644 = vmatprep.subr.mxu0 0.0
        %1645 = vmatpush1.msra.mxu0 0.0
        %1646 = vmatprep.subr.mxu0 0.0
        %1647 = vmatpush1.msra.mxu0 0.0
        %1648 = vmatprep.subr.mxu0 0.0
        %1649 = vmatpush1.msra.mxu0 0.0
        %1650 = vmatprep.subr.mxu0 0.0
        %1651 = vmatpush1.msra.mxu0 0.0
        %1652 = vmatprep.subr.mxu0 0.0
        %1653 = vmatpush1.msra.mxu0 0.0
        %1654 = vmatprep.subr.mxu0 0.0
        %1655 = vmatpush1.msra.mxu0 0.0
        %1656 = vmatprep.subr.mxu0 0.0
        %1657 = vmatpush1.msra.mxu0 0.0
        %1658 = vmatprep.subr.mxu0 0.0
        %1659 = vmatpush1.msra.mxu0 0.0
        %1660 = vmatprep.subr.mxu0 0.0
        %1661 = vmatpush1.msra.mxu0 0.0
        %1662 = vmatprep.subr.mxu0 0.0
        %1663 = vmatpush1.msra.mxu0 0.0
        %1664 = vmatprep.subr.mxu0 0.0
        %1665 = vmatpush1.msra.mxu0 0.0
        %1666 = vmatprep.mubr.f32.mxu0 0.0
        %1667 = vmatmul.mubr.f32.gmra.mrb[0].mxu0 %v1600
        %v1668 = vpop.f32.mrb[0].mxu0
        %v1669 = vadd.f32 0.0, %v1668
        %v1670 = vpop.f32.mrb[0].mxu0
        %1671 = vdwg.mxu0
        %1672 = vrot.lane.b32.xlu0 %v531, 96
        %v1673 = vpop.permute.xlu0 %1672
        %v1676 = vsel %vm1127, %v1214, 0
        %1678 = vmatprep.subr.mxu0 0.0
        %1679 = vmatpush1.msra.mxu0 %v1673
        %1680 = vmatprep.subr.mxu0 0.0
        %1681 = vmatpush1.msra.mxu0 0.0
        %1682 = vmatprep.subr.mxu0 0.0
        %1683 = vmatpush1.msra.mxu0 0.0
        %1684 = vmatprep.subr.mxu0 0.0
        %1685 = vmatpush1.msra.mxu0 0.0
        %1686 = vmatprep.subr.mxu0 0.0
        %1687 = vmatpush1.msra.mxu0 0.0
        %1688 = vmatprep.subr.mxu0 0.0
        %1689 = vmatpush1.msra.mxu0 0.0
        %1690 = vmatprep.subr.mxu0 0.0
        %1691 = vmatpush1.msra.mxu0 0.0
        %1692 = vmatprep.subr.mxu0 0.0
        %1693 = vmatpush1.msra.mxu0 0.0
        %1694 = vmatprep.subr.mxu0 0.0
        %1695 = vmatpush1.msra.mxu0 0.0
        %1696 = vmatprep.subr.mxu0 0.0
        %1697 = vmatpush1.msra.mxu0 0.0
        %1698 = vmatprep.subr.mxu0 0.0
        %1699 = vmatpush1.msra.mxu0 0.0
        %1700 = vmatprep.subr.mxu0 0.0
        %1701 = vmatpush1.msra.mxu0 0.0
        %1702 = vmatprep.subr.mxu0 0.0
        %1703 = vmatpush1.msra.mxu0 0.0
        %1704 = vmatprep.subr.mxu0 0.0
        %1705 = vmatpush1.msra.mxu0 0.0
        %1706 = vmatprep.subr.mxu0 0.0
        %1707 = vmatpush1.msra.mxu0 0.0
        %1708 = vmatprep.subr.mxu0 0.0
        %1709 = vmatpush1.msra.mxu0 0.0
        %1710 = vmatprep.subr.mxu0 0.0
        %1711 = vmatpush1.msra.mxu0 0.0
        %1712 = vmatprep.subr.mxu0 0.0
        %1713 = vmatpush1.msra.mxu0 0.0
        %1714 = vmatprep.subr.mxu0 0.0
        %1715 = vmatpush1.msra.mxu0 0.0
        %1716 = vmatprep.subr.mxu0 0.0
        %1717 = vmatpush1.msra.mxu0 0.0
        %1718 = vmatprep.subr.mxu0 0.0
        %1719 = vmatpush1.msra.mxu0 0.0
        %1720 = vmatprep.subr.mxu0 0.0
        %1721 = vmatpush1.msra.mxu0 0.0
        %1722 = vmatprep.subr.mxu0 0.0
        %1723 = vmatpush1.msra.mxu0 0.0
        %1724 = vmatprep.subr.mxu0 0.0
        %1725 = vmatpush1.msra.mxu0 0.0
        %1726 = vmatprep.subr.mxu0 0.0
        %1727 = vmatpush1.msra.mxu0 0.0
        %1728 = vmatprep.subr.mxu0 0.0
        %1729 = vmatpush1.msra.mxu0 0.0
        %1730 = vmatprep.subr.mxu0 0.0
        %1731 = vmatpush1.msra.mxu0 0.0
        %1732 = vmatprep.subr.mxu0 0.0
        %1733 = vmatpush1.msra.mxu0 0.0
        %1734 = vmatprep.subr.mxu0 0.0
        %1735 = vmatpush1.msra.mxu0 0.0
        %1736 = vmatprep.subr.mxu0 0.0
        %1737 = vmatpush1.msra.mxu0 0.0
        %1738 = vmatprep.subr.mxu0 0.0
        %1739 = vmatpush1.msra.mxu0 0.0
        %1740 = vmatprep.subr.mxu0 0.0
        %1741 = vmatpush1.msra.mxu0 0.0
        %1742 = vmatprep.mubr.f32.mxu0 0.0
        %1743 = vmatmul.mubr.f32.gmra.mrb[0].mxu0 %v1676
        %v1744 = vpop.f32.mrb[0].mxu0
        %v1745 = vadd.f32 0.0, %v1744
        %v1746 = vpop.f32.mrb[0].mxu0
        %1747 = vdwg.mxu0
        %1748 = vrot.lane.b32.xlu0 %v533, 96
        %v1749 = vpop.permute.xlu0 %1748
        %v1752 = vsel %vm1127, %v1215, 0
        %1754 = vmatprep.subr.mxu0 0.0
        %1755 = vmatpush1.msra.mxu0 %v1749
        %1756 = vmatprep.subr.mxu0 0.0
        %1757 = vmatpush1.msra.mxu0 0.0
        %1758 = vmatprep.subr.mxu0 0.0
        %1759 = vmatpush1.msra.mxu0 0.0
        %1760 = vmatprep.subr.mxu0 0.0
        %1761 = vmatpush1.msra.mxu0 0.0
        %1762 = vmatprep.subr.mxu0 0.0
        %1763 = vmatpush1.msra.mxu0 0.0
        %1764 = vmatprep.subr.mxu0 0.0
        %1765 = vmatpush1.msra.mxu0 0.0
        %1766 = vmatprep.subr.mxu0 0.0
        %1767 = vmatpush1.msra.mxu0 0.0
        %1768 = vmatprep.subr.mxu0 0.0
        %1769 = vmatpush1.msra.mxu0 0.0
        %1770 = vmatprep.subr.mxu0 0.0
        %1771 = vmatpush1.msra.mxu0 0.0
        %1772 = vmatprep.subr.mxu0 0.0
        %1773 = vmatpush1.msra.mxu0 0.0
        %1774 = vmatprep.subr.mxu0 0.0
        %1775 = vmatpush1.msra.mxu0 0.0
        %1776 = vmatprep.subr.mxu0 0.0
        %1777 = vmatpush1.msra.mxu0 0.0
        %1778 = vmatprep.subr.mxu0 0.0
        %1779 = vmatpush1.msra.mxu0 0.0
        %1780 = vmatprep.subr.mxu0 0.0
        %1781 = vmatpush1.msra.mxu0 0.0
        %1782 = vmatprep.subr.mxu0 0.0
        %1783 = vmatpush1.msra.mxu0 0.0
        %1784 = vmatprep.subr.mxu0 0.0
        %1785 = vmatpush1.msra.mxu0 0.0
        %1786 = vmatprep.subr.mxu0 0.0
        %1787 = vmatpush1.msra.mxu0 0.0
        %1788 = vmatprep.subr.mxu0 0.0
        %1789 = vmatpush1.msra.mxu0 0.0
        %1790 = vmatprep.subr.mxu0 0.0
        %1791 = vmatpush1.msra.mxu0 0.0
        %1792 = vmatprep.subr.mxu0 0.0
        %1793 = vmatpush1.msra.mxu0 0.0
        %1794 = vmatprep.subr.mxu0 0.0
        %1795 = vmatpush1.msra.mxu0 0.0
        %1796 = vmatprep.subr.mxu0 0.0
        %1797 = vmatpush1.msra.mxu0 0.0
        %1798 = vmatprep.subr.mxu0 0.0
        %1799 = vmatpush1.msra.mxu0 0.0
        %1800 = vmatprep.subr.mxu0 0.0
        %1801 = vmatpush1.msra.mxu0 0.0
        %1802 = vmatprep.subr.mxu0 0.0
        %1803 = vmatpush1.msra.mxu0 0.0
        %1804 = vmatprep.subr.mxu0 0.0
        %1805 = vmatpush1.msra.mxu0 0.0
        %1806 = vmatprep.subr.mxu0 0.0
        %1807 = vmatpush1.msra.mxu0 0.0
        %1808 = vmatprep.subr.mxu0 0.0
        %1809 = vmatpush1.msra.mxu0 0.0
        %1810 = vmatprep.subr.mxu0 0.0
        %1811 = vmatpush1.msra.mxu0 0.0
        %1812 = vmatprep.subr.mxu0 0.0
        %1813 = vmatpush1.msra.mxu0 0.0
        %1814 = vmatprep.subr.mxu0 0.0
        %1815 = vmatpush1.msra.mxu0 0.0
        %1816 = vmatprep.subr.mxu0 0.0
        %1817 = vmatpush1.msra.mxu0 0.0
        %1818 = vmatprep.mubr.f32.mxu0 0.0
        %1819 = vmatmul.mubr.f32.gmra.mrb[0].mxu0 %v1752
        %v1820 = vpop.f32.mrb[0].mxu0
        %v1821 = vadd.f32 0.0, %v1820
        %v1822 = vpop.f32.mrb[0].mxu0
        %1823 = vdwg.mxu0
        %1825 = vrot.lane.b32.xlu0 %v1365, 4
        %v1826 = vpop.permute.xlu0 %1825
        %1829 = vrot.lane.b32.xlu0 %v1441, 8
        %v1830 = vpop.permute.xlu0 %1829
        %1833 = vrot.lane.b32.xlu0 %v1517, 12
        %v1834 = vpop.permute.xlu0 %1833
        %1837 = vrot.lane.b32.xlu0 %v1593, 16
        %v1838 = vpop.permute.xlu0 %1837
        %1841 = vrot.lane.b32.xlu0 %v1669, 20
        %v1842 = vpop.permute.xlu0 %1841
        %1845 = vrot.lane.b32.xlu0 %v1745, 24
        %v1846 = vpop.permute.xlu0 %1845
        %1849 = vrot.lane.b32.xlu0 %v1821, 28
        %v1850 = vpop.permute.xlu0 %1849
        %v1852 = vsel %vm534, %v1289, %v1826
        %v1853 = vsel %vm1127, %v1852, %v1830
        %vm1854 = vcmask 97280
        %v1855 = vsel %vm1854, %v1853, %v1834
        %vm1856 = vcmask 130048
        %v1857 = vsel %vm1856, %v1855, %v1838
        %vm1858 = vcmask 162816
        %v1859 = vsel %vm1858, %v1857, %v1842
        %vm1860 = vcmask 195584
        %v1861 = vsel %vm1860, %v1859, %v1846
        %vm1862 = vcmask 228352
        %v1863 = vsel %vm1862, %v1861, %v1850
        %v1864 = vld [vmem:[#allocation10] sm:$0xff]
        %v1865 = vld [vmem:[#allocation10 + $0x8] sm:$0xff]
        %v1866 = vld [vmem:[#allocation10 + $0x10] sm:$0xff]
        %v1867 = vld [vmem:[#allocation10 + $0x18] sm:$0xff]
        %v1868 = vld [vmem:[%s5] sm:$0x1]
        %v1870 = vlaneseq
        %v1871 = vshrl.u32 %v1870, 7
        %v1872 = vsub.s32 0, %v1871
        %v1873 = vrot.slane %v1868, %v1872
        %v1876 = vsel %vm353, %v1863, 0
        %1878 = vmatprep.subr.mxu0 0.0
        %1879 = vmatpush1.msra.mxu0 %v1864
        %1880 = vmatprep.subr.mxu0 0.0
        %1881 = vmatpush1.msra.mxu0 %v1865
        %1882 = vmatprep.subr.mxu0 0.0
        %1883 = vmatpush1.msra.mxu0 %v1866
        %1884 = vmatprep.subr.mxu0 0.0
        %1885 = vmatpush1.msra.mxu0 %v1867
        %1886 = vmatprep.subr.mxu0 0.0
        %1887 = vmatpush1.msra.mxu0 0.0
        %1888 = vmatprep.subr.mxu0 0.0
        %1889 = vmatpush1.msra.mxu0 0.0
        %1890 = vmatprep.subr.mxu0 0.0
        %1891 = vmatpush1.msra.mxu0 0.0
        %1892 = vmatprep.subr.mxu0 0.0
        %1893 = vmatpush1.msra.mxu0 0.0
        %1894 = vmatprep.subr.mxu0 0.0
        %1895 = vmatpush1.msra.mxu0 0.0
        %1896 = vmatprep.subr.mxu0 0.0
        %1897 = vmatpush1.msra.mxu0 0.0
        %1898 = vmatprep.subr.mxu0 0.0
        %1899 = vmatpush1.msra.mxu0 0.0
        %1900 = vmatprep.subr.mxu0 0.0
        %1901 = vmatpush1.msra.mxu0 0.0
        %1902 = vmatprep.subr.mxu0 0.0
        %1903 = vmatpush1.msra.mxu0 0.0
        %1904 = vmatprep.subr.mxu0 0.0
        %1905 = vmatpush1.msra.mxu0 0.0
        %1906 = vmatprep.subr.mxu0 0.0
        %1907 = vmatpush1.msra.mxu0 0.0
        %1908 = vmatprep.subr.mxu0 0.0
        %1909 = vmatpush1.msra.mxu0 0.0
        %1910 = vmatprep.subr.mxu0 0.0
        %1911 = vmatpush1.msra.mxu0 0.0
        %1912 = vmatprep.subr.mxu0 0.0
        %1913 = vmatpush1.msra.mxu0 0.0
        %1914 = vmatprep.subr.mxu0 0.0
        %1915 = vmatpush1.msra.mxu0 0.0
        %1916 = vmatprep.subr.mxu0 0.0
        %1917 = vmatpush1.msra.mxu0 0.0
        %1918 = vmatprep.subr.mxu0 0.0
        %1919 = vmatpush1.msra.mxu0 0.0
        %1920 = vmatprep.subr.mxu0 0.0
        %1921 = vmatpush1.msra.mxu0 0.0
        %1922 = vmatprep.subr.mxu0 0.0
        %1923 = vmatpush1.msra.mxu0 0.0
        %1924 = vmatprep.subr.mxu0 0.0
        %1925 = vmatpush1.msra.mxu0 0.0
        %1926 = vmatprep.subr.mxu0 0.0
        %1927 = vmatpush1.msra.mxu0 0.0
        %1928 = vmatprep.subr.mxu0 0.0
        %1929 = vmatpush1.msra.mxu0 0.0
        %1930 = vmatprep.subr.mxu0 0.0
        %1931 = vmatpush1.msra.mxu0 0.0
        %1932 = vmatprep.subr.mxu0 0.0
        %1933 = vmatpush1.msra.mxu0 0.0
        %1934 = vmatprep.subr.mxu0 0.0
        %1935 = vmatpush1.msra.mxu0 0.0
        %1936 = vmatprep.subr.mxu0 0.0
        %1937 = vmatpush1.msra.mxu0 0.0
        %1938 = vmatprep.subr.mxu0 0.0
        %1939 = vmatpush1.msra.mxu0 0.0
        %1940 = vmatprep.subr.mxu0 0.0
        %1941 = vmatpush1.msra.mxu0 0.0
        %1942 = vmatprep.mubr.f32.mxu0 0.0
        %1943 = vmatmul.mubr.f32.gmra.mrb[0].mxu0 %v1876
        %v1944 = vpop.f32.mrb[0].mxu0
        %v1945 = vadd.f32 %v1873, %v1944
        %v1946 = vpop.f32.mrb[0].mxu0
        %1947 = vdwg.mxu0
        %1948 = vst.msk [vmem:[%s346] sm:$0xff] %vm353, %v1945
        %s1949 = sand.u32 %s171, 1
        %s1950 = scalar_lea.sflag [#allocation4], %s1949
        %s1951 = sand.u32 %s171, 1
        %s1952 = smul.addr %s1951, 8
        %s1953 = scalar_lea.vmem [#allocation11], %s1952
        // Predicated region
        $region65: #{tpu_custom_call.1} parent=43 // pred_check
          %p1954 = pneg %p181
        $region66: #{tpu_custom_call.1} parent=43 // pred_check_branch
          %1956 = sbr.rel (%p1954) target = $region68
        $region67: #{tpu_custom_call.1} parent=43 // pred_region
          %s1958 = ssub.s32 128, 128
          %1959 = vsyncadd %s1950, %s1958
          %s1960 = smul.addr %s27, 128
          %s1961 = scalar_lea.hbm %s6, %s1960
          %s1963 = sshll.u32 %s1953, 4
          %s1964 = int_to_ptr.vmem [resolvable:$true] %s1963
          %1966 = dma.vmem_to_hbm [thread:$0]  %s1964, 128, %s1961, %s1950
        $region68: #{tpu_custom_call.1} parent=43 // pred_fallthru
          _
      $region44: #{tpu_custom_call.1} parent=5 // pred_fallthru
        _
      %p1967 = scmp.le.s32.totalorder 2, %s22
      // Predicated region
      $region69: #{tpu_custom_call.1} parent=5 // pred_check
        %p1968 = pneg %p1967
      $region70: #{tpu_custom_call.1} parent=5 // pred_check_branch
        %1970 = sbr.rel (%p1968) target = $region72
      $region71: #{tpu_custom_call.1} parent=5 // pred_region
        %s1971 = ssub.s32 %s22, 2
        // Predicated region
        $region73: #{tpu_custom_call.1} parent=71 // pred_check
          %p1972 = pneg %p187
        $region74: #{tpu_custom_call.1} parent=71 // pred_check_branch
          %1974 = sbr.rel (%p1972) target = $region76
        $region75: #{tpu_custom_call.1} parent=71 // pred_region
          %s1975 = sand.u32 %s172, 1
          %s1976 = scalar_lea.sflag [#allocation4], %s1975
          %s1977 = sand.u32 %s172, 1
          %s1978 = smul.addr %s1977, 8
          %s1979 = scalar_lea.vmem [#allocation11], %s1978
          %1980 = dma.done %s1976, 128
        $region76: #{tpu_custom_call.1} parent=71 // pred_fallthru
          _
      $region72: #{tpu_custom_call.1} parent=5 // pred_fallthru
        _
    $region6: #{tpu_custom_call.1} parent=1 // loop_footer
      %s26 = sadd.s32 1, %s22
    $region7: #{tpu_custom_call.1} parent=1 // loop_footer_branch
      %21 = sbr.rel target = $region3
    $region8: #{tpu_custom_call.1} parent=1 // loop_exit
      _
    %1981 = vsyncpa [#allocation3], 1
    %s1982 = scalar_lea.sflag [#allocation3], 1
    %1983 = vsyncpa %s1982, 1
    %1984 = vsyncpa [#allocation6], 1
    %s1985 = scalar_lea.sflag [#allocation6], 1
    %1986 = vsyncpa %s1985, 1
    %1987 = vsyncpa [#allocation9], 1
    %1988 = vsyncpa [#allocation4], 1
    %s1989 = scalar_lea.sflag [#allocation4], 1
    %1990 = vsyncpa %s1989, 1

</llo_original>
